<compile_context>
chip_gen: v5e
topology: v5e:2x2
jax: 0.10.0
libtpu: 0.0.40
codegen_flags: <defaults>
</compile_context>

<pallas_src>
import numpy as np
import jax
import jax.numpy as jnp
from jax import lax
from jax.experimental import pallas as pl
from jax.experimental.pallas import tpu as pltpu

# ---------------------------------------------------------------------------
# Static configuration
# ---------------------------------------------------------------------------
N = 2             # cfg.TRAIN.BATCH_SIZE
H = 16            # cfg.MODEL.H_FEAT
W = 16            # cfg.MODEL.W_FEAT
D = 32            # cfg.MODEL.KB_DIM (== control_dim)
M = 32            # cfg.MODEL.NMN.MEM_DIM (== KB_DIM)
L = 8             # cfg.MODEL.NMN.STACK.LENGTH
TEMP = 1.0        # cfg.MODEL.NMN.STACK.SOFT_SHARPEN_TEMP
HW = H * W
NUM_MODULES = 9   # ['_NoOp','_Find','_Transform','_Filter','_And','_Or',
                  #  '_Scene','_DescribeOne','_DescribeTwo']
EPS = 1e-12       # F.normalize eps


# ---------------------------------------------------------------------------
# Pallas kernel: one grid step == B_blk batch elements, all 9 modules + average
# ---------------------------------------------------------------------------
def nmn_kernel(cs_ref, kb_ref, prob_ref, mem_ref, stack_ref, ptr_ref,
               wci_ref, bci_ref, wconv_ref, bconv_ref, wmem_ref, bmem_ref,
               scat_ref, out_stack_ref, out_vec_ref):
    f32 = jnp.float32
    bf16 = jnp.bfloat16

    cs = cs_ref[0]          # (B, D)
    prob = prob_ref[0]      # (B, NUM_MODULES)
    mem = mem_ref[0]        # (B, M)
    p = ptr_ref[0]          # (B, L)
    scat = scat_ref[...]    # (L, 4L) = [S_fw | S_bw | S_fw@S_bw | I]
    eye_m = scat[:, 3 * L:4 * L]
    wconv = wconv_ref[...]  # (3, D)
    bconv = bconv_ref[...]  # (3, 1)

    B = cs.shape[0]
    pw = [prob[:, m:m + 1] for m in range(NUM_MODULES)]   # (B,1) module weights

    # --- stack-pointer moves: one small batched matmul with host-built shifts
    p_all = jnp.dot(p, scat, preferred_element_type=f32)  # (B, 4L)
    p_fw = p_all[:, 0:L]
    p_bw = p_all[:, L:2 * L]
    p_bwfw = p_all[:, 2 * L:3 * L]
    one_m_pfw = 1.0 - p_fw

    # --- four *_ci linear maps as one batched (B,D)@(D,4D) matmul -------------
    c_all = jnp.dot(cs, wci_ref[...], preferred_element_type=f32) + bci_ref[...]

    # --- Filter helpers (batched scalars / rows) ------------------------------
    d22 = jnp.sum(p_fw * p_fw, axis=-1, keepdims=True)      # (B,1)
    d12 = jnp.sum(p_bwfw * p_fw, axis=-1, keepdims=True)    # (B,1)
    r4_2 = p_fw * one_m_pfw                                  # (B,L)
    r4_3 = p_bwfw * one_m_pfw                                # (B,L)

    # --- probability-weighted pointer average, soft-sharpened (batched) -------
    ptr_mix = ((pw[0] + pw[2] + pw[7]) * p + (pw[1] + pw[6]) * p_fw
               + (pw[4] + pw[5] + pw[8]) * p_bw + pw[3] * p_bwfw)
    z = ptr_mix * (1.0 / TEMP)
    z = z - jnp.max(z, axis=-1, keepdims=True)
    ez = jnp.exp(z)
    ptr_out = ez * pl.reciprocal(jnp.sum(ez, axis=-1, keepdims=True), approx=True)

    # --- stack pass-through weight (diag term of the averaged write) ----------
    q = (pw[0] * jnp.ones_like(p)
         + (pw[1] + pw[6]) * one_m_pfw
         + (pw[2] + pw[7]) * (1.0 - p)
         + pw[3] * one_m_pfw * (1.0 - p_bwfw)
         + (pw[4] + pw[5] + pw[8]) * (1.0 - p_bw))           # (B, L)

    # --- rank-1 write weights for the six attention maps (batched rows) -------
    r6_0 = pw[1] * p_fw + pw[3] * p_fw * (1.0 - p_bwfw)      # att_find (Find+Filter)
    r6_1 = pw[2] * p                                         # att_trans
    r6_2 = pw[6] * p_fw                                      # att_scene
    r6_3 = pw[4] * p_bw                                      # att_and
    r6_4 = pw[5] * p_bw                                      # att_or
    r6_5 = pw[3] * p_bwfw                                    # Filter's And write

    zero3 = jnp.zeros((3, D), f32)
    ones_row = jnp.ones((1, D), f32)

    def l2n(x):  # F.normalize: x * rsqrt(max(||x||^2, eps^2))  (EUP rsqrt)
        return x * lax.rsqrt(jnp.maximum(jnp.sum(x * x, axis=-1, keepdims=True),
                                         EPS * EPS))

    elt1_rows = []
    elt2_rows = []

    for b in range(B):                       # static, unrolled
        stack_b = stack_ref[0, b]            # (L, HW)  f32
        kb_b = kb_ref[0, b]                  # (2D, HW) bf16 = [kb ; kb^2]

        # all reads from the incoming stack as one (4,L)@(L,HW) matmul
        R4 = jnp.concatenate([p[b:b + 1], p_bw[b:b + 1],
                              r4_2[b:b + 1], r4_3[b:b + 1]], axis=0)
        reads = jnp.dot(R4, stack_b, preferred_element_type=f32)    # (4, HW)
        a_top = reads[0:1]     # read at ptr
        a_bot = reads[1:2]     # read at move_bw(ptr)
        r_f2 = reads[2:3]      # Filter helper: sum_l p_fw(1-p_fw)   * stack_l
        r_f1 = reads[3:4]      # Filter helper: sum_l p_bwfw(1-p_fw) * stack_l

        # softmax-weighted KB extraction for a_top/a_bot: contract the lane axes
        a2 = jnp.concatenate([a_top, a_bot], axis=0)                # (2, HW)
        a2 = a2 - jnp.max(a2, axis=-1, keepdims=True)
        e2 = jnp.exp(a2)
        soft2 = e2 * pl.reciprocal(jnp.sum(e2, axis=-1, keepdims=True), approx=True)
        ka = lax.dot_general(soft2.astype(bf16), kb_b[0:D],
                             (((1,), (1,)), ((), ())),
                             preferred_element_type=f32)            # (2, D)
        ka_top = ka[0:1]
        ka_bot = ka[1:2]

        c_find = c_all[b:b + 1, 0:D]
        c_trans = c_all[b:b + 1, D:2 * D]
        c_d1 = c_all[b:b + 1, 2 * D:3 * D]
        c_d2 = c_all[b:b + 1, 3 * D:4 * D]

        # Find / Transform / Scene:  conv1x1(l2norm(kb ⊙ c)) ==
        #   ((w⊙c)·kb) * rsqrt((c⊙c)·kb^2) + b  — one (6,2D)@(2D,HW) matmul
        ct = c_trans * ka_top
        U = jnp.concatenate([wconv[0:1] * c_find, wconv[1:2] * ct, wconv[2:3]],
                            axis=0)                                  # (3, D)
        V = jnp.concatenate([c_find * c_find, ct * ct, ones_row], axis=0)
        Lhs = jnp.concatenate([jnp.concatenate([U, zero3], axis=1),
                               jnp.concatenate([zero3, V], axis=1)], axis=0)
        nd = jnp.dot(Lhs.astype(bf16), kb_b, preferred_element_type=f32)  # (6, HW)
        num = nd[0:3]
        den = nd[3:6]
        att3 = num * lax.rsqrt(jnp.maximum(den, EPS * EPS)) + bconv
        att_find = att3[0:1]
        att_trans = att3[1:2]
        att_scene = att3[2:3]

        # Filter = Find then And (reads from the post-Find stack expanded)
        att_fand = jnp.minimum(att_find * d12[b:b + 1] + r_f1,
                               att_find * d22[b:b + 1] + r_f2)
        att_and = jnp.minimum(a_bot, a_top)
        att_or = jnp.maximum(a_bot, a_top)

        # DescribeOne / DescribeTwo element products (mem matmul batched later)
        elt1_rows.append(l2n(c_d1 * ka_top))
        elt2_rows.append(l2n(c_d2 * ka_bot * ka_top))

        # averaged stack: 6 rank-1 writes on the MXU + f32 diag(q)·stack pass-through
        R6 = jnp.concatenate([r6_0[b:b + 1], r6_1[b:b + 1], r6_2[b:b + 1],
                              r6_3[b:b + 1], r6_4[b:b + 1], r6_5[b:b + 1]],
                             axis=0)                                 # (6, L)
        A6 = jnp.concatenate([att_find, att_trans, att_scene,
                              att_and, att_or, att_fand], axis=0)    # (6, HW)
        write_part = lax.dot_general(R6, A6, (((0,), (0,)), ((), ())),
                                     preferred_element_type=f32)     # (L, HW)
        q_col = jnp.sum(q[b:b + 1] * eye_m, axis=-1, keepdims=True)  # (L, 1)
        out_stack_ref[0, b] = write_part + q_col * stack_b

    # --- Describe* memories via one (2B, 2D+M)@(2D+M, 2M) matmul --------------
    E1 = jnp.concatenate(elt1_rows, axis=0)                          # (B, D)
    E2 = jnp.concatenate(elt2_rows, axis=0)                          # (B, D)
    X = jnp.concatenate([jnp.concatenate([cs, mem, E1], axis=1),
                         jnp.concatenate([cs, mem, E2], axis=1)], axis=0)
    mm = jnp.dot(X, wmem_ref[...], preferred_element_type=f32) + bmem_ref[...]
    mem_d1 = mm[0:B, 0:M]                # describeone_mem output
    mem_d2 = mm[B:2 * B, M:2 * M]        # describetwo_mem output
    mem_avg = pw[0] * mem + pw[7] * mem_d1 + pw[8] * mem_d2          # (B, M)

    # merged (ptr | mem) output row: one writeback stream
    out_vec_ref[0] = jnp.concatenate([ptr_out, mem_avg], axis=-1)    # (B, L+M)


# ---------------------------------------------------------------------------
# Wrapper
# ---------------------------------------------------------------------------
def _default_block_batch(n):
    """Batch elements per grid step.

    Single-TensorCore chips (v5e/v6e): whole batch in one step (amortize the
    ~0.35us per-step overhead).  Dual-TC chips (v7x / megacore): keep >= 2 grid
    steps so dimension_semantics=("parallel",) can shard across both cores.
    """
    try:
        kind = jax.devices()[0].device_kind.lower()
    except Exception:
        kind = ""
    single_tc = any(t in kind for t in ("lite", "v5e", "v6e"))
    if single_tc or n < 2:
        return n
    bb = max(1, n // 2)
    return bb if n % bb == 0 else 1


def nmn_forward_pallas(control_state, kb_batch, module_prob, mem_prev,
                       att_stack_prev, stack_ptr_prev, params, block_batch=None):
    Wci, bci, wconv, bconv, Wmem, bmem = params
    Nn = control_state.shape[0]
    f32 = jnp.float32
    bf16 = jnp.bfloat16

    if block_batch is None:
        block_batch = _default_block_batch(Nn)
    if Nn % block_batch != 0:
        block_batch = 1
    B = block_batch
    G = Nn // B

    # Lane-dense layouts (HW on the 128-lane axis); kb packed bf16 [kb ; kb^2].
    kb_dm = jnp.transpose(kb_batch.reshape(Nn, HW, D).astype(f32), (0, 2, 1))  # (N, D, HW)
    kb_pack = jnp.concatenate([kb_dm, kb_dm * kb_dm], axis=1).astype(bf16)     # (N, 2D, HW)
    kb_pack = kb_pack.reshape(G, B, 2 * D, HW)
    stack_lhw = jnp.transpose(att_stack_prev.reshape(Nn, HW, L).astype(f32),
                              (0, 2, 1)).reshape(G, B, L, HW)
    cs3 = control_state.astype(f32).reshape(G, B, D)
    prob3 = module_prob.astype(f32).reshape(G, B, NUM_MODULES)
    mem3 = mem_prev.astype(f32).reshape(G, B, M)
    ptr3 = stack_ptr_prev.astype(f32).reshape(G, B, L)

    # Pack the four *_ci linears and the two describe*_mem linears so each
    # group is a single MXU matmul inside the kernel.
    Wci_pack = jnp.transpose(Wci, (1, 0, 2)).reshape(D, 4 * D)                 # (D, 4D)
    bci_pack = bci.reshape(1, 4 * D)
    Wmem_pack = jnp.transpose(Wmem, (1, 0, 2)).reshape(2 * D + M, 2 * M)       # (96, 64)
    bmem_pack = bmem.reshape(1, 2 * M)

    # Host-built guarded stack-pointer shift matrices + identity.
    S_fw = np.zeros((L, L), np.float32)
    for j in range(L - 1):
        S_fw[j, j + 1] = 1.0
    S_fw[L - 1, L - 1] += 1.0
    S_bw = np.zeros((L, L), np.float32)
    for j in range(1, L):
        S_bw[j, j - 1] = 1.0
    S_bw[0, 0] += 1.0
    S_cat = jnp.asarray(np.concatenate(
        [S_fw, S_bw, S_fw @ S_bw, np.eye(L, dtype=np.float32)], axis=1))       # (L, 4L)

    def batched(shape):
        nd = len(shape)
        return pl.BlockSpec((1,) + shape, lambda n, _nd=nd: (n,) + (0,) * _nd)

    full2 = lambda shape: pl.BlockSpec(shape, lambda n: (0, 0))

    grid_spec = pltpu.PrefetchScalarGridSpec(
        num_scalar_prefetch=0,
        grid=(G,),
        in_specs=[
            batched((B, D)),                 # control_state
            batched((B, 2 * D, HW)),         # packed bf16 [kb ; kb^2]
            batched((B, NUM_MODULES)),       # module_prob
            batched((B, M)),                 # mem_prev
            batched((B, L, HW)),             # att_stack_prev, stack-slot-major
            batched((B, L)),                 # stack_ptr_prev
            full2((D, 4 * D)),               # packed *_ci weights
            full2((1, 4 * D)),               # packed *_ci biases
            full2((3, D)),                   # find/transform/scene 1x1-conv weights
            full2((3, 1)),                   # conv biases
            full2((2 * D + M, 2 * M)),       # packed describe*_mem weights
            full2((1, 2 * M)),               # packed describe*_mem biases
            full2((L, 4 * L)),               # [S_fw | S_bw | S_fw@S_bw | I]
        ],
        out_specs=[
            batched((B, L, HW)),             # att_stack_avg (lane-dense)
            batched((B, L + M)),             # [stack_ptr_avg | mem_avg]
        ],
    )
    out_shapes = (
        jax.ShapeDtypeStruct((G, B, L, HW), f32),
        jax.ShapeDtypeStruct((G, B, L + M), f32),
    )
    att_blk, vec_blk = pl.pallas_call(
        nmn_kernel,
        out_shape=out_shapes,
        grid_spec=grid_spec,
        compiler_params=pltpu.CompilerParams(dimension_semantics=("parallel",)),
    )(cs3, kb_pack, prob3, mem3, stack_lhw, ptr3,
      Wci_pack, bci_pack, wconv, bconv, Wmem_pack, bmem_pack, S_cat)

    att_stack_avg = jnp.transpose(att_blk.reshape(Nn, L, H, W), (0, 2, 3, 1))
    vec = vec_blk.reshape(Nn, L + M)
    return att_stack_avg, vec[:, :L], vec[:, L:]


# ---------------------------------------------------------------------------
# Pure-JAX reference (mirrors the PyTorch forward semantics) for validation
# ---------------------------------------------------------------------------
def reference_forward(cs, kb, prob, mem, stack, ptr, params):
    Wci, bci, wconv, bconv, Wmem, bmem = params
    Nn = cs.shape[0]

    def l2norm(x):
        n = jnp.sqrt(jnp.sum(x * x, axis=-1, keepdims=True))
        return x / jnp.maximum(n, 1e-12)

    def read(st, p):
        return jnp.sum(st * p[:, None, :], axis=-1, keepdims=True)

    def write(st, p, att):
        pe = p[:, None, :]
        return att * pe + st * (1.0 - pe)

    S_fw = np.zeros((L, L), np.float32)
    for j in range(L - 1):
        S_fw[j, j + 1] = 1.0
    S_fw[L - 1, L - 1] += 1.0
    S_bw = np.zeros((L, L), np.float32)
    for j in range(1, L):
        S_bw[j, j - 1] = 1.0
    S_bw[0, 0] += 1.0
    S_fw = jnp.asarray(S_fw)
    S_bw = jnp.asarray(S_bw)

    move_fw = lambda p: p @ S_fw
    move_bw = lambda p: p @ S_bw

    def extract(att):
        a = jax.nn.softmax(att.reshape(Nn, -1), axis=1).reshape(att.shape)
        return jnp.sum(kb * a, axis=1)

    linear = lambda x, i: x @ Wci[i] + bci[i]
    conv = lambda x, i: jnp.sum(x * wconv[i][None, None, :], -1, keepdims=True) + bconv[i, 0]
    zero_mem = jnp.zeros((Nn, M), jnp.float32)

    def Find(st, p):
        elt = l2norm(kb * linear(cs, 0)[:, None, :])
        p2 = move_fw(p)
        return write(st, p2, conv(elt, 0)), p2, zero_mem

    def Transform(st, p):
        ka = extract(read(st, p))[:, None, :]
        elt = l2norm(kb * linear(cs, 1)[:, None, :] * ka)
        return write(st, p, conv(elt, 1)), p, zero_mem

    def And(st, p):
        a2 = read(st, p); p2 = move_bw(p); a1 = read(st, p2)
        return write(st, p2, jnp.minimum(a1, a2)), p2, zero_mem

    def Or(st, p):
        a2 = read(st, p); p2 = move_bw(p); a1 = read(st, p2)
        return write(st, p2, jnp.maximum(a1, a2)), p2, zero_mem

    def Filter(st, p):
        st1, p1, _ = Find(st, p)
        st2, p2, _ = And(st1, p1)
        return st2, p2, zero_mem

    def Scene(st, p):
        p2 = move_fw(p)
        return write(st, p2, conv(l2norm(kb), 2)), p2, zero_mem

    def DescribeOne(st, p):
        a = read(st, p)
        elt = l2norm(linear(cs, 2) * extract(a))
        memo = jnp.concatenate([cs, mem, elt], axis=1) @ Wmem[0] + bmem[0]
        return write(st, p, jnp.zeros_like(a)), p, memo

    def DescribeTwo(st, p):
        a2 = read(st, p); p2 = move_bw(p); a1 = read(st, p2)
        elt = l2norm(linear(cs, 3) * extract(a1) * extract(a2))
        memo = jnp.concatenate([cs, mem, elt], axis=1) @ Wmem[1] + bmem[1]
        return write(st, p2, jnp.zeros_like(a2)), p2, memo

    results = [(stack, ptr, mem), Find(stack, ptr), Transform(stack, ptr),
               Filter(stack, ptr), And(stack, ptr), Or(stack, ptr),
               Scene(stack, ptr), DescribeOne(stack, ptr), DescribeTwo(stack, ptr)]
    st_all = jnp.stack([r[0] for r in results], axis=-1)
    p_all = jnp.stack([r[1] for r in results], axis=-1)
    m_all = jnp.stack([r[2] for r in results], axis=-1)
    st_avg = jnp.sum(prob[:, None, None, :] * st_all, axis=-1)
    p_avg = jax.nn.softmax(jnp.sum(prob[:, None, :] * p_all, axis=-1) / TEMP, axis=1)
    m_avg = jnp.sum(prob[:, None, :] * m_all, axis=-1)
    return st_avg, p_avg, m_avg


# ---------------------------------------------------------------------------
# Main
# ---------------------------------------------------------------------------
if __name__ == "__main__":
    key = jax.random.PRNGKey(0)
    ks = jax.random.split(key, 12)

    control_state = jax.random.normal(ks[0], (N, D), jnp.float32)
    kb_batch = jax.random.normal(ks[1], (N, H, W, D), jnp.float32)
    module_prob = jax.nn.softmax(jax.random.normal(ks[2], (N, NUM_MODULES), jnp.float32), axis=-1)
    mem_prev = 0.1 * jax.random.normal(ks[3], (N, M), jnp.float32)
    att_stack_prev = jax.random.normal(ks[4], (N, H, W, L), jnp.float32)
    stack_ptr_prev = jax.nn.softmax(2.0 * jax.random.normal(ks[5], (N, L), jnp.float32), axis=-1)

    # Deterministic parameters (nn.Linear weights stored pre-transposed as [in, out]).
    Wci = 0.1 * jax.random.normal(ks[6], (4, D, D), jnp.float32)        # find/transform/desc1/desc2 _ci
    bci = 0.1 * jax.random.normal(ks[7], (4, D), jnp.float32)
    wconv = 0.1 * jax.random.normal(ks[8], (3, D), jnp.float32)         # find/transform/scene 1x1 convs
    bconv = 0.1 * jax.random.normal(ks[9], (3, 1), jnp.float32)
    Wmem = 0.1 * jax.random.normal(ks[10], (2, 2 * D + M, M), jnp.float32)  # desc1/desc2 _mem
    bmem = 0.1 * jax.random.normal(ks[11], (2, M), jnp.float32)
    params = (Wci, bci, wconv, bconv, Wmem, bmem)

    outs = nmn_forward_pallas(control_state, kb_batch, module_prob, mem_prev,
                              att_stack_prev, stack_ptr_prev, params)
    outs = jax.block_until_ready(outs)

    refs = reference_forward(control_state, kb_batch.reshape(N, HW, D), module_prob,
                             mem_prev, att_stack_prev.reshape(N, HW, L),
                             stack_ptr_prev, params)
    refs = (refs[0].reshape(N, H, W, L), refs[1], refs[2])
    # Tolerance covers MXU bf16-pass rounding and approx EUP reciprocals.
    for o, r in zip(outs, refs):
        np.testing.assert_allclose(np.asarray(o), np.asarray(r), rtol=5e-3, atol=5e-3)

    print("KERNEL_OK")
</pallas_src>

<mosaic_0001>
module attributes {stable_mosaic.version = 11 : i64} {
  func.func @nmn_kernel(%arg0: i32, %arg1: memref<1x1x32xf32, #tpu.memory_space<vmem>>, %arg2: memref<1x1x64x256xbf16, #tpu.memory_space<vmem>>, %arg3: memref<1x1x9xf32, #tpu.memory_space<vmem>>, %arg4: memref<1x1x32xf32, #tpu.memory_space<vmem>>, %arg5: memref<1x1x8x256xf32, #tpu.memory_space<vmem>>, %arg6: memref<1x1x8xf32, #tpu.memory_space<vmem>>, %arg7: memref<32x128xf32, #tpu.memory_space<vmem>>, %arg8: memref<1x128xf32, #tpu.memory_space<vmem>>, %arg9: memref<3x32xf32, #tpu.memory_space<vmem>>, %arg10: memref<3x1xf32, #tpu.memory_space<vmem>>, %arg11: memref<96x64xf32, #tpu.memory_space<vmem>>, %arg12: memref<1x64xf32, #tpu.memory_space<vmem>>, %arg13: memref<8x32xf32, #tpu.memory_space<vmem>>, %arg14: memref<1x1x8x256xf32, #tpu.memory_space<vmem>>, %arg15: memref<1x1x40xf32, #tpu.memory_space<vmem>>) attributes {dimension_semantics = [#tpu.dimension_semantics<parallel>], iteration_bounds = array<i64: 2>, scalar_prefetch = 0 : i64, scratch_operands = 0 : i64, tpu.core_type = #tpu.core_type<tc>, window_params = [{transform_indices = @transform_0, window_bounds = array<i64: 1, 1, 32>}, {transform_indices = @transform_1, window_bounds = array<i64: 1, 1, 64, 256>}, {transform_indices = @transform_2, window_bounds = array<i64: 1, 1, 9>}, {transform_indices = @transform_3, window_bounds = array<i64: 1, 1, 32>}, {transform_indices = @transform_4, window_bounds = array<i64: 1, 1, 8, 256>}, {transform_indices = @transform_5, window_bounds = array<i64: 1, 1, 8>}, {pipeline_mode = #tpu.pipeline_mode<synchronous>, transform_indices = @transform_6, window_bounds = array<i64: 32, 128>}, {pipeline_mode = #tpu.pipeline_mode<synchronous>, transform_indices = @transform_7, window_bounds = array<i64: 1, 128>}, {pipeline_mode = #tpu.pipeline_mode<synchronous>, transform_indices = @transform_8, window_bounds = array<i64: 3, 32>}, {pipeline_mode = #tpu.pipeline_mode<synchronous>, transform_indices = @transform_9, window_bounds = array<i64: 3, 1>}, {pipeline_mode = #tpu.pipeline_mode<synchronous>, transform_indices = @transform_10, window_bounds = array<i64: 96, 64>}, {pipeline_mode = #tpu.pipeline_mode<synchronous>, transform_indices = @transform_11, window_bounds = array<i64: 1, 64>}, {pipeline_mode = #tpu.pipeline_mode<synchronous>, transform_indices = @transform_12, window_bounds = array<i64: 8, 32>}, {transform_indices = @transform_13, window_bounds = array<i64: 1, 1, 8, 256>}, {transform_indices = @transform_14, window_bounds = array<i64: 1, 1, 40>}]} {
    %c0 = arith.constant 0 : index
    %c0_0 = arith.constant 0 : index
    %c0_1 = arith.constant 0 : index
    %0 = vector.load %arg1[%c0, %c0_0, %c0_1] : memref<1x1x32xf32, #tpu.memory_space<vmem>>, vector<1x1x32xf32>
    %1 = vector.shape_cast %0 : vector<1x1x32xf32> to vector<1x32xf32>
    %c0_2 = arith.constant 0 : index
    %c0_3 = arith.constant 0 : index
    %c0_4 = arith.constant 0 : index
    %2 = vector.load %arg3[%c0_2, %c0_3, %c0_4] : memref<1x1x9xf32, #tpu.memory_space<vmem>>, vector<1x1x9xf32>
    %3 = vector.shape_cast %2 : vector<1x1x9xf32> to vector<1x9xf32>
    %c0_5 = arith.constant 0 : index
    %c0_6 = arith.constant 0 : index
    %c0_7 = arith.constant 0 : index
    %4 = vector.load %arg4[%c0_5, %c0_6, %c0_7] : memref<1x1x32xf32, #tpu.memory_space<vmem>>, vector<1x1x32xf32>
    %5 = vector.shape_cast %4 : vector<1x1x32xf32> to vector<1x32xf32>
    %c0_8 = arith.constant 0 : index
    %c0_9 = arith.constant 0 : index
    %c0_10 = arith.constant 0 : index
    %6 = vector.load %arg6[%c0_8, %c0_9, %c0_10] : memref<1x1x8xf32, #tpu.memory_space<vmem>>, vector<1x1x8xf32>
    %7 = vector.shape_cast %6 : vector<1x1x8xf32> to vector<1x8xf32>
    %c0_11 = arith.constant 0 : index
    %c0_12 = arith.constant 0 : index
    %8 = vector.load %arg13[%c0_11, %c0_12] : memref<8x32xf32, #tpu.memory_space<vmem>>, vector<8x32xf32>
    %9 = vector.extract_strided_slice %8 {offsets = [0, 24], sizes = [8, 8], strides = [1, 1]} : vector<8x32xf32> to vector<8x8xf32>
    %c0_13 = arith.constant 0 : index
    %c0_14 = arith.constant 0 : index
    %10 = vector.load %arg9[%c0_13, %c0_14] : memref<3x32xf32, #tpu.memory_space<vmem>>, vector<3x32xf32>
    %c0_15 = arith.constant 0 : index
    %c0_16 = arith.constant 0 : index
    %11 = vector.load %arg10[%c0_15, %c0_16] : memref<3x1xf32, #tpu.memory_space<vmem>>, vector<3x1xf32>
    %12 = vector.extract_strided_slice %3 {offsets = [0, 0], sizes = [1, 1], strides = [1, 1]} : vector<1x9xf32> to vector<1x1xf32>
    %13 = vector.extract_strided_slice %3 {offsets = [0, 1], sizes = [1, 1], strides = [1, 1]} : vector<1x9xf32> to vector<1x1xf32>
    %14 = vector.extract_strided_slice %3 {offsets = [0, 2], sizes = [1, 1], strides = [1, 1]} : vector<1x9xf32> to vector<1x1xf32>
    %15 = vector.extract_strided_slice %3 {offsets = [0, 3], sizes = [1, 1], strides = [1, 1]} : vector<1x9xf32> to vector<1x1xf32>
    %16 = vector.extract_strided_slice %3 {offsets = [0, 4], sizes = [1, 1], strides = [1, 1]} : vector<1x9xf32> to vector<1x1xf32>
    %17 = vector.extract_strided_slice %3 {offsets = [0, 5], sizes = [1, 1], strides = [1, 1]} : vector<1x9xf32> to vector<1x1xf32>
    %18 = vector.extract_strided_slice %3 {offsets = [0, 6], sizes = [1, 1], strides = [1, 1]} : vector<1x9xf32> to vector<1x1xf32>
    %19 = vector.extract_strided_slice %3 {offsets = [0, 7], sizes = [1, 1], strides = [1, 1]} : vector<1x9xf32> to vector<1x1xf32>
    %20 = vector.extract_strided_slice %3 {offsets = [0, 8], sizes = [1, 1], strides = [1, 1]} : vector<1x9xf32> to vector<1x1xf32>
    %cst = arith.constant dense<0.000000e+00> : vector<1x32xf32>
    %21 = tpu.matmul %7, %8, %cst {dimension_numbers = #tpu.dot_dimension_numbers<[1], [0], [0], [1], [0, 0, 1, 1], [], []>} : vector<1x8xf32>, vector<8x32xf32>, vector<1x32xf32> -> vector<1x32xf32>
    %22 = vector.extract_strided_slice %21 {offsets = [0, 0], sizes = [1, 8], strides = [1, 1]} : vector<1x32xf32> to vector<1x8xf32>
    %23 = vector.extract_strided_slice %21 {offsets = [0, 8], sizes = [1, 8], strides = [1, 1]} : vector<1x32xf32> to vector<1x8xf32>
    %24 = vector.extract_strided_slice %21 {offsets = [0, 16], sizes = [1, 8], strides = [1, 1]} : vector<1x32xf32> to vector<1x8xf32>
    %cst_17 = arith.constant 1.000000e+00 : f32
    %25 = vector.broadcast %cst_17 : f32 to vector<1x8xf32>
    %26 = arith.subf %25, %22 : vector<1x8xf32>
    %c0_18 = arith.constant 0 : index
    %c0_19 = arith.constant 0 : index
    %27 = vector.load %arg7[%c0_18, %c0_19] : memref<32x128xf32, #tpu.memory_space<vmem>>, vector<32x128xf32>
    %cst_20 = arith.constant dense<0.000000e+00> : vector<1x128xf32>
    %28 = tpu.matmul %1, %27, %cst_20 {dimension_numbers = #tpu.dot_dimension_numbers<[1], [0], [0], [1], [0, 0, 1, 1], [], []>} : vector<1x32xf32>, vector<32x128xf32>, vector<1x128xf32> -> vector<1x128xf32>
    %c0_21 = arith.constant 0 : index
    %c0_22 = arith.constant 0 : index
    %29 = vector.load %arg8[%c0_21, %c0_22] : memref<1x128xf32, #tpu.memory_space<vmem>>, vector<1x128xf32>
    %30 = arith.addf %28, %29 : vector<1x128xf32>
    %31 = arith.mulf %22, %22 : vector<1x8xf32>
    %cst_23 = arith.constant dense<0.000000e+00> : vector<1xf32>
    %32 = vector.multi_reduction <add>, %31, %cst_23 [1] : vector<1x8xf32> to vector<1xf32>
    %33 = vector.shape_cast %32 : vector<1xf32> to vector<1x1xf32>
    %34 = arith.mulf %24, %22 : vector<1x8xf32>
    %cst_24 = arith.constant dense<0.000000e+00> : vector<1xf32>
    %35 = vector.multi_reduction <add>, %34, %cst_24 [1] : vector<1x8xf32> to vector<1xf32>
    %36 = vector.shape_cast %35 : vector<1xf32> to vector<1x1xf32>
    %37 = arith.mulf %22, %26 : vector<1x8xf32>
    %38 = arith.mulf %24, %26 : vector<1x8xf32>
    %39 = arith.addf %12, %14 : vector<1x1xf32>
    %40 = arith.addf %39, %19 : vector<1x1xf32>
    %41 = vector.broadcast %40 : vector<1x1xf32> to vector<1x8xf32>
    %42 = arith.mulf %41, %7 : vector<1x8xf32>
    %43 = arith.addf %13, %18 : vector<1x1xf32>
    %44 = vector.broadcast %43 : vector<1x1xf32> to vector<1x8xf32>
    %45 = arith.mulf %44, %22 : vector<1x8xf32>
    %46 = arith.addf %42, %45 : vector<1x8xf32>
    %47 = arith.addf %16, %17 : vector<1x1xf32>
    %48 = arith.addf %47, %20 : vector<1x1xf32>
    %49 = vector.broadcast %48 : vector<1x1xf32> to vector<1x8xf32>
    %50 = arith.mulf %49, %23 : vector<1x8xf32>
    %51 = arith.addf %46, %50 : vector<1x8xf32>
    %52 = vector.broadcast %15 : vector<1x1xf32> to vector<1x8xf32>
    %53 = arith.mulf %52, %24 : vector<1x8xf32>
    %54 = arith.addf %51, %53 : vector<1x8xf32>
    %cst_25 = arith.constant 1.000000e+00 : f32
    %55 = vector.broadcast %cst_25 : f32 to vector<1x8xf32>
    %56 = arith.mulf %54, %55 : vector<1x8xf32>
    %cst_26 = arith.constant dense<0xFF800000> : vector<1xf32>
    %57 = vector.multi_reduction <maximumf>, %56, %cst_26 [1] : vector<1x8xf32> to vector<1xf32>
    %58 = vector.shape_cast %57 : vector<1xf32> to vector<1x1xf32>
    %59 = vector.broadcast %58 : vector<1x1xf32> to vector<1x8xf32>
    %60 = arith.subf %56, %59 : vector<1x8xf32>
    %61 = math.exp %60 : vector<1x8xf32>
    %cst_27 = arith.constant dense<0.000000e+00> : vector<1xf32>
    %62 = vector.multi_reduction <add>, %61, %cst_27 [1] : vector<1x8xf32> to vector<1xf32>
    %63 = vector.shape_cast %62 : vector<1xf32> to vector<1x1xf32>
    %64 = tpu.reciprocal %63 {approx = true} : vector<1x1xf32> -> vector<1x1xf32>
    %65 = vector.broadcast %64 : vector<1x1xf32> to vector<1x8xf32>
    %66 = arith.mulf %61, %65 : vector<1x8xf32>
    %cst_28 = arith.constant 1.000000e+00 : f32
    %67 = vector.broadcast %cst_28 : f32 to vector<1x8xf32>
    %68 = vector.broadcast %12 : vector<1x1xf32> to vector<1x8xf32>
    %69 = arith.mulf %68, %67 : vector<1x8xf32>
    %70 = arith.addf %13, %18 : vector<1x1xf32>
    %71 = vector.broadcast %70 : vector<1x1xf32> to vector<1x8xf32>
    %72 = arith.mulf %71, %26 : vector<1x8xf32>
    %73 = arith.addf %69, %72 : vector<1x8xf32>
    %74 = arith.addf %14, %19 : vector<1x1xf32>
    %cst_29 = arith.constant 1.000000e+00 : f32
    %75 = vector.broadcast %cst_29 : f32 to vector<1x8xf32>
    %76 = arith.subf %75, %7 : vector<1x8xf32>
    %77 = vector.broadcast %74 : vector<1x1xf32> to vector<1x8xf32>
    %78 = arith.mulf %77, %76 : vector<1x8xf32>
    %79 = arith.addf %73, %78 : vector<1x8xf32>
    %80 = vector.broadcast %15 : vector<1x1xf32> to vector<1x8xf32>
    %81 = arith.mulf %80, %26 : vector<1x8xf32>
    %cst_30 = arith.constant 1.000000e+00 : f32
    %82 = vector.broadcast %cst_30 : f32 to vector<1x8xf32>
    %83 = arith.subf %82, %24 : vector<1x8xf32>
    %84 = arith.mulf %81, %83 : vector<1x8xf32>
    %85 = arith.addf %79, %84 : vector<1x8xf32>
    %86 = arith.addf %16, %17 : vector<1x1xf32>
    %87 = arith.addf %86, %20 : vector<1x1xf32>
    %cst_31 = arith.constant 1.000000e+00 : f32
    %88 = vector.broadcast %cst_31 : f32 to vector<1x8xf32>
    %89 = arith.subf %88, %23 : vector<1x8xf32>
    %90 = vector.broadcast %87 : vector<1x1xf32> to vector<1x8xf32>
    %91 = arith.mulf %90, %89 : vector<1x8xf32>
    %92 = arith.addf %85, %91 : vector<1x8xf32>
    %93 = vector.broadcast %13 : vector<1x1xf32> to vector<1x8xf32>
    %94 = arith.mulf %93, %22 : vector<1x8xf32>
    %95 = vector.broadcast %15 : vector<1x1xf32> to vector<1x8xf32>
    %96 = arith.mulf %95, %22 : vector<1x8xf32>
    %cst_32 = arith.constant 1.000000e+00 : f32
    %97 = vector.broadcast %cst_32 : f32 to vector<1x8xf32>
    %98 = arith.subf %97, %24 : vector<1x8xf32>
    %99 = arith.mulf %96, %98 : vector<1x8xf32>
    %100 = arith.addf %94, %99 : vector<1x8xf32>
    %101 = vector.broadcast %14 : vector<1x1xf32> to vector<1x8xf32>
    %102 = arith.mulf %101, %7 : vector<1x8xf32>
    %103 = vector.broadcast %18 : vector<1x1xf32> to vector<1x8xf32>
    %104 = arith.mulf %103, %22 : vector<1x8xf32>
    %105 = vector.broadcast %16 : vector<1x1xf32> to vector<1x8xf32>
    %106 = arith.mulf %105, %23 : vector<1x8xf32>
    %107 = vector.broadcast %17 : vector<1x1xf32> to vector<1x8xf32>
    %108 = arith.mulf %107, %23 : vector<1x8xf32>
    %109 = vector.broadcast %15 : vector<1x1xf32> to vector<1x8xf32>
    %110 = arith.mulf %109, %24 : vector<1x8xf32>
    %cst_33 = arith.constant 0.000000e+00 : f32
    %111 = vector.broadcast %cst_33 : f32 to vector<3x32xf32>
    %cst_34 = arith.constant 1.000000e+00 : f32
    %112 = vector.broadcast %cst_34 : f32 to vector<1x32xf32>
    %c0_35 = arith.constant 0 : index
    %c0_36 = arith.constant 0 : index
    %c0_37 = arith.constant 0 : index
    %c0_38 = arith.constant 0 : index
    %113 = vector.load %arg5[%c0_35, %c0_36, %c0_37, %c0_38] : memref<1x1x8x256xf32, #tpu.memory_space<vmem>>, vector<1x1x8x256xf32>
    %114 = vector.shape_cast %113 : vector<1x1x8x256xf32> to vector<8x256xf32>
    %c0_39 = arith.constant 0 : index
    %c0_40 = arith.constant 0 : index
    %c0_41 = arith.constant 0 : index
    %c0_42 = arith.constant 0 : index
    %115 = vector.load %arg2[%c0_39, %c0_40, %c0_41, %c0_42] : memref<1x1x64x256xbf16, #tpu.memory_space<vmem>>, vector<1x1x64x256xbf16>
    %116 = vector.shape_cast %115 : vector<1x1x64x256xbf16> to vector<64x256xbf16>
    %117 = tpu.concatenate %7, %23, %37, %38 in 0 : vector<1x8xf32>, vector<1x8xf32>, vector<1x8xf32>, vector<1x8xf32> -> vector<4x8xf32>
    %cst_43 = arith.constant dense<0.000000e+00> : vector<4x256xf32>
    %118 = tpu.matmul %117, %114, %cst_43 {dimension_numbers = #tpu.dot_dimension_numbers<[1], [0], [0], [1], [0, 0, 1, 1], [], []>} : vector<4x8xf32>, vector<8x256xf32>, vector<4x256xf32> -> vector<4x256xf32>
    %119 = vector.extract_strided_slice %118 {offsets = [0, 0], sizes = [1, 256], strides = [1, 1]} : vector<4x256xf32> to vector<1x256xf32>
    %120 = vector.extract_strided_slice %118 {offsets = [1, 0], sizes = [1, 256], strides = [1, 1]} : vector<4x256xf32> to vector<1x256xf32>
    %121 = vector.extract_strided_slice %118 {offsets = [2, 0], sizes = [1, 256], strides = [1, 1]} : vector<4x256xf32> to vector<1x256xf32>
    %122 = vector.extract_strided_slice %118 {offsets = [3, 0], sizes = [1, 256], strides = [1, 1]} : vector<4x256xf32> to vector<1x256xf32>
    %123 = tpu.concatenate %119, %120 in 0 : vector<1x256xf32>, vector<1x256xf32> -> vector<2x256xf32>
    %cst_44 = arith.constant dense<0xFF800000> : vector<2xf32>
    %124 = vector.multi_reduction <maximumf>, %123, %cst_44 [1] : vector<2x256xf32> to vector<2xf32>
    %125 = vector.shape_cast %124 : vector<2xf32> to vector<2x1xf32>
    %126 = vector.broadcast %125 : vector<2x1xf32> to vector<2x256xf32>
    %127 = arith.subf %123, %126 : vector<2x256xf32>
    %128 = math.exp %127 : vector<2x256xf32>
    %cst_45 = arith.constant dense<0.000000e+00> : vector<2xf32>
    %129 = vector.multi_reduction <add>, %128, %cst_45 [1] : vector<2x256xf32> to vector<2xf32>
    %130 = vector.shape_cast %129 : vector<2xf32> to vector<2x1xf32>
    %131 = tpu.reciprocal %130 {approx = true} : vector<2x1xf32> -> vector<2x1xf32>
    %132 = vector.broadcast %131 : vector<2x1xf32> to vector<2x256xf32>
    %133 = arith.mulf %128, %132 : vector<2x256xf32>
    %134 = arith.truncf %133 : vector<2x256xf32> to vector<2x256xbf16>
    %135 = vector.extract_strided_slice %116 {offsets = [0, 0], sizes = [32, 256], strides = [1, 1]} : vector<64x256xbf16> to vector<32x256xbf16>
    %cst_46 = arith.constant dense<0.000000e+00> : vector<2x32xf32>
    %136 = tpu.matmul %134, %135, %cst_46 {dimension_numbers = #tpu.dot_dimension_numbers<[1], [1], [0], [0], [0, 0, 1, 0], [], []>} : vector<2x256xbf16>, vector<32x256xbf16>, vector<2x32xf32> -> vector<2x32xf32>
    %137 = vector.extract_strided_slice %136 {offsets = [0, 0], sizes = [1, 32], strides = [1, 1]} : vector<2x32xf32> to vector<1x32xf32>
    %138 = vector.extract_strided_slice %136 {offsets = [1, 0], sizes = [1, 32], strides = [1, 1]} : vector<2x32xf32> to vector<1x32xf32>
    %139 = vector.extract_strided_slice %30 {offsets = [0, 0], sizes = [1, 32], strides = [1, 1]} : vector<1x128xf32> to vector<1x32xf32>
    %140 = vector.extract_strided_slice %30 {offsets = [0, 32], sizes = [1, 32], strides = [1, 1]} : vector<1x128xf32> to vector<1x32xf32>
    %141 = vector.extract_strided_slice %30 {offsets = [0, 64], sizes = [1, 32], strides = [1, 1]} : vector<1x128xf32> to vector<1x32xf32>
    %142 = vector.extract_strided_slice %30 {offsets = [0, 96], sizes = [1, 32], strides = [1, 1]} : vector<1x128xf32> to vector<1x32xf32>
    %143 = arith.mulf %140, %137 : vector<1x32xf32>
    %144 = vector.extract_strided_slice %10 {offsets = [0, 0], sizes = [1, 32], strides = [1, 1]} : vector<3x32xf32> to vector<1x32xf32>
    %145 = arith.mulf %144, %139 : vector<1x32xf32>
    %146 = vector.extract_strided_slice %10 {offsets = [1, 0], sizes = [1, 32], strides = [1, 1]} : vector<3x32xf32> to vector<1x32xf32>
    %147 = arith.mulf %146, %143 : vector<1x32xf32>
    %148 = vector.extract_strided_slice %10 {offsets = [2, 0], sizes = [1, 32], strides = [1, 1]} : vector<3x32xf32> to vector<1x32xf32>
    %149 = tpu.concatenate %145, %147, %148 in 0 : vector<1x32xf32>, vector<1x32xf32>, vector<1x32xf32> -> vector<3x32xf32>
    %150 = arith.mulf %139, %139 : vector<1x32xf32>
    %151 = arith.mulf %143, %143 : vector<1x32xf32>
    %152 = tpu.concatenate %150, %151, %112 in 0 : vector<1x32xf32>, vector<1x32xf32>, vector<1x32xf32> -> vector<3x32xf32>
    %153 = tpu.concatenate %149, %111 in 1 : vector<3x32xf32>, vector<3x32xf32> -> vector<3x64xf32>
    %154 = tpu.concatenate %111, %152 in 1 : vector<3x32xf32>, vector<3x32xf32> -> vector<3x64xf32>
    %155 = tpu.concatenate %153, %154 in 0 : vector<3x64xf32>, vector<3x64xf32> -> vector<6x64xf32>
    %156 = arith.truncf %155 : vector<6x64xf32> to vector<6x64xbf16>
    %cst_47 = arith.constant dense<0.000000e+00> : vector<6x256xf32>
    %157 = tpu.matmul %156, %116, %cst_47 {dimension_numbers = #tpu.dot_dimension_numbers<[1], [0], [0], [1], [0, 0, 1, 1], [], []>} : vector<6x64xbf16>, vector<64x256xbf16>, vector<6x256xf32> -> vector<6x256xf32>
    %158 = vector.extract_strided_slice %157 {offsets = [0, 0], sizes = [3, 256], strides = [1, 1]} : vector<6x256xf32> to vector<3x256xf32>
    %159 = vector.extract_strided_slice %157 {offsets = [3, 0], sizes = [3, 256], strides = [1, 1]} : vector<6x256xf32> to vector<3x256xf32>
    %cst_48 = arith.constant 1.000000e-24 : f32
    %160 = vector.broadcast %cst_48 : f32 to vector<3x256xf32>
    %161 = arith.maximumf %159, %160 : vector<3x256xf32>
    %162 = math.rsqrt %161 : vector<3x256xf32>
    %163 = arith.mulf %158, %162 : vector<3x256xf32>
    %164 = vector.broadcast %11 : vector<3x1xf32> to vector<3x256xf32>
    %165 = arith.addf %163, %164 : vector<3x256xf32>
    %166 = vector.extract_strided_slice %165 {offsets = [0, 0], sizes = [1, 256], strides = [1, 1]} : vector<3x256xf32> to vector<1x256xf32>
    %167 = vector.extract_strided_slice %165 {offsets = [1, 0], sizes = [1, 256], strides = [1, 1]} : vector<3x256xf32> to vector<1x256xf32>
    %168 = vector.extract_strided_slice %165 {offsets = [2, 0], sizes = [1, 256], strides = [1, 1]} : vector<3x256xf32> to vector<1x256xf32>
    %169 = vector.broadcast %36 : vector<1x1xf32> to vector<1x256xf32>
    %170 = arith.mulf %166, %169 : vector<1x256xf32>
    %171 = arith.addf %170, %122 : vector<1x256xf32>
    %172 = vector.broadcast %33 : vector<1x1xf32> to vector<1x256xf32>
    %173 = arith.mulf %166, %172 : vector<1x256xf32>
    %174 = arith.addf %173, %121 : vector<1x256xf32>
    %175 = arith.minimumf %171, %174 : vector<1x256xf32>
    %176 = arith.minimumf %120, %119 : vector<1x256xf32>
    %177 = arith.maximumf %120, %119 : vector<1x256xf32>
    %178 = arith.mulf %141, %137 : vector<1x32xf32>
    %179 = arith.mulf %178, %178 : vector<1x32xf32>
    %cst_49 = arith.constant dense<0.000000e+00> : vector<1xf32>
    %180 = vector.multi_reduction <add>, %179, %cst_49 [1] : vector<1x32xf32> to vector<1xf32>
    %181 = vector.shape_cast %180 : vector<1xf32> to vector<1x1xf32>
    %cst_50 = arith.constant 1.000000e-24 : f32
    %182 = vector.broadcast %cst_50 : f32 to vector<1x1xf32>
    %183 = arith.maximumf %181, %182 : vector<1x1xf32>
    %184 = math.rsqrt %183 : vector<1x1xf32>
    %185 = vector.broadcast %184 : vector<1x1xf32> to vector<1x32xf32>
    %186 = arith.mulf %178, %185 : vector<1x32xf32>
    %187 = arith.mulf %142, %138 : vector<1x32xf32>
    %188 = arith.mulf %187, %137 : vector<1x32xf32>
    %189 = arith.mulf %188, %188 : vector<1x32xf32>
    %cst_51 = arith.constant dense<0.000000e+00> : vector<1xf32>
    %190 = vector.multi_reduction <add>, %189, %cst_51 [1] : vector<1x32xf32> to vector<1xf32>
    %191 = vector.shape_cast %190 : vector<1xf32> to vector<1x1xf32>
    %cst_52 = arith.constant 1.000000e-24 : f32
    %192 = vector.broadcast %cst_52 : f32 to vector<1x1xf32>
    %193 = arith.maximumf %191, %192 : vector<1x1xf32>
    %194 = math.rsqrt %193 : vector<1x1xf32>
    %195 = vector.broadcast %194 : vector<1x1xf32> to vector<1x32xf32>
    %196 = arith.mulf %188, %195 : vector<1x32xf32>
    %197 = tpu.concatenate %100, %102, %104, %106, %108, %110 in 0 : vector<1x8xf32>, vector<1x8xf32>, vector<1x8xf32>, vector<1x8xf32>, vector<1x8xf32>, vector<1x8xf32> -> vector<6x8xf32>
    %198 = tpu.concatenate %166, %167, %168, %176, %177, %175 in 0 : vector<1x256xf32>, vector<1x256xf32>, vector<1x256xf32>, vector<1x256xf32>, vector<1x256xf32>, vector<1x256xf32> -> vector<6x256xf32>
    %cst_53 = arith.constant dense<0.000000e+00> : vector<8x256xf32>
    %199 = tpu.matmul %197, %198, %cst_53 {dimension_numbers = #tpu.dot_dimension_numbers<[0], [0], [1], [1], [0, 1, 1, 1], [], []>} : vector<6x8xf32>, vector<6x256xf32>, vector<8x256xf32> -> vector<8x256xf32>
    %200 = vector.broadcast %92 : vector<1x8xf32> to vector<8x8xf32>
    %201 = arith.mulf %200, %9 : vector<8x8xf32>
    %cst_54 = arith.constant dense<0.000000e+00> : vector<8xf32>
    %202 = vector.multi_reduction <add>, %201, %cst_54 [1] : vector<8x8xf32> to vector<8xf32>
    %203 = vector.shape_cast %202 : vector<8xf32> to vector<8x1xf32>
    %204 = vector.broadcast %203 : vector<8x1xf32> to vector<8x256xf32>
    %205 = arith.mulf %204, %114 : vector<8x256xf32>
    %206 = arith.addf %199, %205 : vector<8x256xf32>
    %c0_55 = arith.constant 0 : index
    %c0_56 = arith.constant 0 : index
    %c0_57 = arith.constant 0 : index
    %c0_58 = arith.constant 0 : index
    %207 = vector.load %arg14[%c0_55, %c0_56, %c0_57, %c0_58] : memref<1x1x8x256xf32, #tpu.memory_space<vmem>>, vector<1x1x8x256xf32>
    %208 = vector.shape_cast %207 : vector<1x1x8x256xf32> to vector<8x256xf32>
    %209 = vector.shape_cast %206 : vector<8x256xf32> to vector<1x1x8x256xf32>
    tpu.vector_store %arg14[%c0_55, %c0_56, %c0_57, %c0_58], %209 {strides = array<i32>} : memref<1x1x8x256xf32, #tpu.memory_space<vmem>>, vector<1x1x8x256xf32>,
    %210 = tpu.concatenate %1, %5, %186 in 1 : vector<1x32xf32>, vector<1x32xf32>, vector<1x32xf32> -> vector<1x96xf32>
    %211 = tpu.concatenate %1, %5, %196 in 1 : vector<1x32xf32>, vector<1x32xf32>, vector<1x32xf32> -> vector<1x96xf32>
    %212 = tpu.concatenate %210, %211 in 0 : vector<1x96xf32>, vector<1x96xf32> -> vector<2x96xf32>
    %c0_59 = arith.constant 0 : index
    %c0_60 = arith.constant 0 : index
    %213 = vector.load %arg11[%c0_59, %c0_60] : memref<96x64xf32, #tpu.memory_space<vmem>>, vector<96x64xf32>
    %cst_61 = arith.constant dense<0.000000e+00> : vector<2x64xf32>
    %214 = tpu.matmul %212, %213, %cst_61 {dimension_numbers = #tpu.dot_dimension_numbers<[1], [0], [0], [1], [0, 0, 1, 1], [], []>} : vector<2x96xf32>, vector<96x64xf32>, vector<2x64xf32> -> vector<2x64xf32>
    %c0_62 = arith.constant 0 : index
    %c0_63 = arith.constant 0 : index
    %215 = vector.load %arg12[%c0_62, %c0_63] : memref<1x64xf32, #tpu.memory_space<vmem>>, vector<1x64xf32>
    %216 = vector.broadcast %215 : vector<1x64xf32> to vector<2x64xf32>
    %217 = arith.addf %214, %216 : vector<2x64xf32>
    %218 = vector.extract_strided_slice %217 {offsets = [0, 0], sizes = [1, 32], strides = [1, 1]} : vector<2x64xf32> to vector<1x32xf32>
    %219 = vector.extract_strided_slice %217 {offsets = [1, 32], sizes = [1, 32], strides = [1, 1]} : vector<2x64xf32> to vector<1x32xf32>
    %220 = vector.broadcast %12 : vector<1x1xf32> to vector<1x32xf32>
    %221 = arith.mulf %220, %5 : vector<1x32xf32>
    %222 = vector.broadcast %19 : vector<1x1xf32> to vector<1x32xf32>
    %223 = arith.mulf %222, %218 : vector<1x32xf32>
    %224 = arith.addf %221, %223 : vector<1x32xf32>
    %225 = vector.broadcast %20 : vector<1x1xf32> to vector<1x32xf32>
    %226 = arith.mulf %225, %219 : vector<1x32xf32>
    %227 = arith.addf %224, %226 : vector<1x32xf32>
    %228 = tpu.concatenate %66, %227 in 1 : vector<1x8xf32>, vector<1x32xf32> -> vector<1x40xf32>
    %c0_64 = arith.constant 0 : index
    %c0_65 = arith.constant 0 : index
    %c0_66 = arith.constant 0 : index
    %229 = vector.load %arg15[%c0_64, %c0_65, %c0_66] : memref<1x1x40xf32, #tpu.memory_space<vmem>>, vector<1x1x40xf32>
    %230 = vector.shape_cast %229 : vector<1x1x40xf32> to vector<1x40xf32>
    %231 = vector.shape_cast %228 : vector<1x40xf32> to vector<1x1x40xf32>
    tpu.vector_store %arg15[%c0_64, %c0_65, %c0_66], %231 {strides = array<i32>} : memref<1x1x40xf32, #tpu.memory_space<vmem>>, vector<1x1x40xf32>,
    return
  }
  func.func @transform_0(%arg0: i32) -> (i32, i32, i32) {
    %c0_i32 = arith.constant 0 : i32
    %c0_i32_0 = arith.constant 0 : i32
    %c0_i32_1 = arith.constant 0 : i32
    return %arg0, %c0_i32, %c0_i32_0 : i32, i32, i32
  }
  func.func @transform_1(%arg0: i32) -> (i32, i32, i32, i32) {
    %c0_i32 = arith.constant 0 : i32
    %c0_i32_0 = arith.constant 0 : i32
    %c0_i32_1 = arith.constant 0 : i32
    %c0_i32_2 = arith.constant 0 : i32
    return %arg0, %c0_i32, %c0_i32_0, %c0_i32_1 : i32, i32, i32, i32
  }
  func.func @transform_2(%arg0: i32) -> (i32, i32, i32) {
    %c0_i32 = arith.constant 0 : i32
    %c0_i32_0 = arith.constant 0 : i32
    %c0_i32_1 = arith.constant 0 : i32
    return %arg0, %c0_i32, %c0_i32_0 : i32, i32, i32
  }
  func.func @transform_3(%arg0: i32) -> (i32, i32, i32) {
    %c0_i32 = arith.constant 0 : i32
    %c0_i32_0 = arith.constant 0 : i32
    %c0_i32_1 = arith.constant 0 : i32
    return %arg0, %c0_i32, %c0_i32_0 : i32, i32, i32
  }
  func.func @transform_4(%arg0: i32) -> (i32, i32, i32, i32) {
    %c0_i32 = arith.constant 0 : i32
    %c0_i32_0 = arith.constant 0 : i32
    %c0_i32_1 = arith.constant 0 : i32
    %c0_i32_2 = arith.constant 0 : i32
    return %arg0, %c0_i32, %c0_i32_0, %c0_i32_1 : i32, i32, i32, i32
  }
  func.func @transform_5(%arg0: i32) -> (i32, i32, i32) {
    %c0_i32 = arith.constant 0 : i32
    %c0_i32_0 = arith.constant 0 : i32
    %c0_i32_1 = arith.constant 0 : i32
    return %arg0, %c0_i32, %c0_i32_0 : i32, i32, i32
  }
  func.func @transform_6(%arg0: i32) -> (i32, i32) {
    %c0_i32 = arith.constant 0 : i32
    %c0_i32_0 = arith.constant 0 : i32
    %c0_i32_1 = arith.constant 0 : i32
    return %c0_i32, %c0_i32_0 : i32, i32
  }
  func.func @transform_7(%arg0: i32) -> (i32, i32) {
    %c0_i32 = arith.constant 0 : i32
    %c0_i32_0 = arith.constant 0 : i32
    %c0_i32_1 = arith.constant 0 : i32
    return %c0_i32, %c0_i32_0 : i32, i32
  }
  func.func @transform_8(%arg0: i32) -> (i32, i32) {
    %c0_i32 = arith.constant 0 : i32
    %c0_i32_0 = arith.constant 0 : i32
    %c0_i32_1 = arith.constant 0 : i32
    return %c0_i32, %c0_i32_0 : i32, i32
  }
  func.func @transform_9(%arg0: i32) -> (i32, i32) {
    %c0_i32 = arith.constant 0 : i32
    %c0_i32_0 = arith.constant 0 : i32
    %c0_i32_1 = arith.constant 0 : i32
    return %c0_i32, %c0_i32_0 : i32, i32
  }
  func.func @transform_10(%arg0: i32) -> (i32, i32) {
    %c0_i32 = arith.constant 0 : i32
    %c0_i32_0 = arith.constant 0 : i32
    %c0_i32_1 = arith.constant 0 : i32
    return %c0_i32, %c0_i32_0 : i32, i32
  }
  func.func @transform_11(%arg0: i32) -> (i32, i32) {
    %c0_i32 = arith.constant 0 : i32
    %c0_i32_0 = arith.constant 0 : i32
    %c0_i32_1 = arith.constant 0 : i32
    return %c0_i32, %c0_i32_0 : i32, i32
  }
  func.func @transform_12(%arg0: i32) -> (i32, i32) {
    %c0_i32 = arith.constant 0 : i32
    %c0_i32_0 = arith.constant 0 : i32
    %c0_i32_1 = arith.constant 0 : i32
    return %c0_i32, %c0_i32_0 : i32, i32
  }
  func.func @transform_13(%arg0: i32) -> (i32, i32, i32, i32) {
    %c0_i32 = arith.constant 0 : i32
    %c0_i32_0 = arith.constant 0 : i32
    %c0_i32_1 = arith.constant 0 : i32
    %c0_i32_2 = arith.constant 0 : i32
    return %arg0, %c0_i32, %c0_i32_0, %c0_i32_1 : i32, i32, i32, i32
  }
  func.func @transform_14(%arg0: i32) -> (i32, i32, i32) {
    %c0_i32 = arith.constant 0 : i32
    %c0_i32_0 = arith.constant 0 : i32
    %c0_i32_1 = arith.constant 0 : i32
    return %arg0, %c0_i32, %c0_i32_0 : i32, i32, i32
  }
}

</mosaic_0001>

<llo_original>
// kernel: tpu_custom_call.1
$region0: #{tpu_custom_call.1}
  #allocation0 [shape = 'u32[]', space=smem, size = 0x4, offset = 0x4, fixed_abs, tag = 'smem constant byte address 0x4 - core index']
  #allocation1 [shape = 'u32[72,128]{1,0:T(1,128)}', space=vmem, size = 0x9000, scoped, tag = 'internal scratch']
  %s0 = inlined_call_operand.hbm [shape: f32[2,1,32], index: 0, kind: input, shape index: {}]
  %s1 = inlined_call_operand.vmem [shape: bf16[2,1,64,256], index: 1, kind: input, shape index: {}]
  %s2 = inlined_call_operand.hbm [shape: f32[2,1,9], index: 2, kind: input, shape index: {}]
  %s3 = inlined_call_operand.hbm [shape: f32[2,1,32], index: 3, kind: input, shape index: {}]
  %s4 = inlined_call_operand.vmem [shape: f32[2,1,8,256], index: 4, kind: input, shape index: {}]
  %s5 = inlined_call_operand.hbm [shape: f32[2,1,8], index: 5, kind: input, shape index: {}]
  %s6 = inlined_call_operand.hbm [shape: f32[32,128], index: 6, kind: input, shape index: {}]
  %s7 = inlined_call_operand.vmem [shape: f32[1,128], index: 7, kind: input, shape index: {}]
  %s8 = inlined_call_operand.vmem [shape: f32[3,32], index: 8, kind: input, shape index: {}]
  %s9 = inlined_call_operand.vmem [shape: f32[3,1], index: 9, kind: input, shape index: {}]
  %s10 = inlined_call_operand.vmem [shape: f32[96,64], index: 10, kind: input, shape index: {}]
  %s11 = inlined_call_operand.hbm [shape: f32[1,64], index: 11, kind: input, shape index: {}]
  %s12 = inlined_call_operand.vmem [shape: f32[8,32], index: 12, kind: input, shape index: {}]
  %s13 = inlined_call_operand.hbm [shape: f32[2,1,8,256], index: 13, kind: output, shape index: {0}]
  %s14 = inlined_call_operand.hbm [shape: f32[2,1,40], index: 14, kind: output, shape index: {1}]
  %15 = xla_tuple %s13, %s14
  %s16 = sld [smem:[#allocation0]]
  $region117: #{tpu_custom_call.1} parent=0
    _
  %s18 = ssub.s32 1, %s16
  %s19 = scalar_select 0, %s18, %s16
  $region1: #{tpu_custom_call.1} parent=0
    #allocation2 [shape = 'u8[1024]{0}', space=vmem, size = 0x400, scoped, tag = 'input window, operand 0']
    #allocation3 [shape = 's32[2]{0}', space=sflag, size = 0x8, scoped, tag = 'scoped memory for tpu_custom_call.1']
    #allocation4 [shape = 's32[2]{0}', space=sflag, size = 0x8, scoped, tag = 'scoped memory for tpu_custom_call.1']
    #allocation5 [shape = 'u8[1024]{0}', space=vmem, size = 0x400, scoped, tag = 'input window, operand 2']
    #allocation6 [shape = 's32[2]{0}', space=sflag, size = 0x8, scoped, tag = 'scoped memory for tpu_custom_call.1']
    #allocation7 [shape = 'u8[1024]{0}', space=vmem, size = 0x400, scoped, tag = 'input window, operand 3']
    #allocation8 [shape = 'u8[1024]{0}', space=vmem, size = 0x400, scoped, tag = 'input window, operand 5']
    #allocation9 [shape = 's32[2]{0}', space=sflag, size = 0x8, scoped, tag = 'scoped memory for tpu_custom_call.1']
    #allocation10 [shape = 'u8[16384]{0}', space=vmem, size = 0x4000, scoped, tag = 'input window, operand 6, single buffered']
    #allocation11 [shape = 'u8[512]{0}', space=vmem, size = 0x400, scoped, tag = 'input window, operand 11, single buffered']
    #allocation12 [shape = 's32[1]{0}', space=sflag, size = 0x4, scoped, tag = 'scoped memory for tpu_custom_call.1']
    #allocation13 [shape = 'u8[16384]{0}', space=vmem, size = 0x4000, scoped, tag = 'output window, operand 0']
    #allocation14 [shape = 'u8[1024]{0}', space=vmem, size = 0x400, scoped, tag = 'output window, operand 1']
    #allocation15 [shape = 's32[2]{0}', space=sflag, size = 0x8, scoped, tag = 'scoped memory for tpu_custom_call.1']
    %20 = vsyncpa [#allocation3], 0
    %s21 = scalar_lea.sflag [#allocation3], 1
    %22 = vsyncpa %s21, 0
    %23 = vsyncpa [#allocation6], 0
    %s24 = scalar_lea.sflag [#allocation6], 1
    %25 = vsyncpa %s24, 0
    %26 = vsyncpa [#allocation9], 0
    %s27 = scalar_lea.sflag [#allocation9], 1
    %28 = vsyncpa %s27, 0
    %29 = vsyncpa [#allocation12], 0
    %30 = vsyncpa [#allocation4], 0
    %s31 = scalar_lea.sflag [#allocation4], 1
    %32 = vsyncpa %s31, 0
    %33 = vsyncpa [#allocation15], 0
    %s34 = scalar_lea.sflag [#allocation15], 1
    %35 = vsyncpa %s34, 0
    loop: start=0, step=1, limit=4
    $region2: #{tpu_custom_call.1} parent=1 // loop_pre_header
      _
    $region3: #{tpu_custom_call.1} parent=1 // loop_header
      %s37 = sphi 0, %s41
      %p38 = scmp.ge.s32.totalorder %s37, 4
      %s47 = sphi 0, %s49
      %s50 = sphi 0, %s47
      %s51 = sphi 0, %s50
      %s67 = sphi 0, %s51
      %s73 = sphi 0, %s75
      %s76 = sphi 0, %s73
      %s77 = sphi 0, %s76
      %s93 = sphi 0, %s77
      %s99 = sphi 0, %s101
      %s102 = sphi 0, %s99
      %s103 = sphi 0, %s102
      %s119 = sphi 0, %s103
      %s125 = sphi 0, %s127
      %s128 = sphi 0, %s125
      %s129 = sphi 0, %s128
      %s145 = sphi 0, %s129
      %s151 = sphi 0, %s153
      %s154 = sphi 0, %s151
      %s155 = sphi 0, %s154
      %s171 = sphi 0, %s155
      %s177 = sphi 0, %s179
      %s180 = sphi 0, %s177
      %s181 = sphi 0, %s180
      %s197 = sphi 0, %s181
      %s201 = sphi 0, %s201
      %s203 = sphi 0, %s201
      %s204 = sphi 0, %s203
      %s218 = sphi 0, %s204
      %s222 = sphi 0, %s222
      %s224 = sphi 0, %s222
      %s225 = sphi 0, %s224
      %s239 = sphi 0, %s225
      %s243 = sphi 0, %s243
      %s245 = sphi 0, %s243
      %s246 = sphi 0, %s245
      %s260 = sphi 0, %s246
      %s264 = sphi 0, %s264
      %s266 = sphi 0, %s264
      %s267 = sphi 0, %s266
      %s281 = sphi 0, %s267
      %s285 = sphi 0, %s285
      %s287 = sphi 0, %s285
      %s288 = sphi 0, %s287
      %s302 = sphi 0, %s288
      %s306 = sphi 0, %s306
      %s308 = sphi 0, %s306
      %s309 = sphi 0, %s308
      %s323 = sphi 0, %s309
      %s327 = sphi 0, %s327
      %s329 = sphi 0, %s327
      %s330 = sphi 0, %s329
      %s344 = sphi 0, %s330
      %s350 = sphi 0, %s352
      %s353 = sphi 0, %s350
      %s354 = sphi 0, %s353
      %s370 = sphi 0, %s354
      %s376 = sphi 0, %s378
      %s379 = sphi 0, %s376
      %s380 = sphi 0, %s379
      %s396 = sphi 0, %s380
    $region4: #{tpu_custom_call.1} parent=1 // loop_header_branch
      %40 = sbr.rel (%p38) target = $region8
    $region5: #{tpu_custom_call.1} parent=1 // loop_body
      %s42 = ssub.s32 %s37, 1
      %s43 = ssub.s32 %s37, 2
      %s44 = sadd.s32 %s37, 1
      %s45 = ssub.s32 %s37, %s44
      %p46 = scmp.eq.s32.totalorder %s45, 0
      %s48 = sadd.s32 %s47, 1
      %s49 = scalar_select %p46, %s47, %s48
      %p52 = pneg %p46
      %p53 = scmp.eq.s32.totalorder %s37, 1
      %p54 = por %p52, %p53
      %p55 = scmp.ne.s32.totalorder %s47, %s50
      %p56 = scmp.eq.s32.totalorder %s37, 0
      %p57 = por %p55, %p56
      %p58 = scmp.ne.s32.totalorder %s47, %s50
      %p59 = scmp.eq.s32.totalorder %s42, 1
      %p60 = por %p58, %p59
      %p61 = scmp.ne.s32.totalorder %s50, %s51
      %p62 = scmp.eq.s32.totalorder %s42, 0
      %p63 = por %p61, %p62
      %p64 = scmp.ne.s32.totalorder %s50, %s51
      %p65 = scmp.eq.s32.totalorder %s43, 1
      %p66 = por %p64, %p65
      %p68 = scmp.ne.s32.totalorder %s51, %s67
      %p69 = scmp.eq.s32.totalorder %s43, 0
      %p70 = por %p68, %p69
      %s71 = ssub.s32 %s37, %s44
      %p72 = scmp.eq.s32.totalorder %s71, 0
      %s74 = sadd.s32 %s73, 1
      %s75 = scalar_select %p72, %s73, %s74
      %p78 = pneg %p72
      %p79 = scmp.eq.s32.totalorder %s37, 1
      %p80 = por %p78, %p79
      %p81 = scmp.ne.s32.totalorder %s73, %s76
      %p82 = scmp.eq.s32.totalorder %s37, 0
      %p83 = por %p81, %p82
      %p84 = scmp.ne.s32.totalorder %s73, %s76
      %p85 = scmp.eq.s32.totalorder %s42, 1
      %p86 = por %p84, %p85
      %p87 = scmp.ne.s32.totalorder %s76, %s77
      %p88 = scmp.eq.s32.totalorder %s42, 0
      %p89 = por %p87, %p88
      %p90 = scmp.ne.s32.totalorder %s76, %s77
      %p91 = scmp.eq.s32.totalorder %s43, 1
      %p92 = por %p90, %p91
      %p94 = scmp.ne.s32.totalorder %s77, %s93
      %p95 = scmp.eq.s32.totalorder %s43, 0
      %p96 = por %p94, %p95
      %s97 = ssub.s32 %s37, %s44
      %p98 = scmp.eq.s32.totalorder %s97, 0
      %s100 = sadd.s32 %s99, 1
      %s101 = scalar_select %p98, %s99, %s100
      %p104 = pneg %p98
      %p105 = scmp.eq.s32.totalorder %s37, 1
      %p106 = por %p104, %p105
      %p107 = scmp.ne.s32.totalorder %s99, %s102
      %p108 = scmp.eq.s32.totalorder %s37, 0
      %p109 = por %p107, %p108
      %p110 = scmp.ne.s32.totalorder %s99, %s102
      %p111 = scmp.eq.s32.totalorder %s42, 1
      %p112 = por %p110, %p111
      %p113 = scmp.ne.s32.totalorder %s102, %s103
      %p114 = scmp.eq.s32.totalorder %s42, 0
      %p115 = por %p113, %p114
      %p116 = scmp.ne.s32.totalorder %s102, %s103
      %p117 = scmp.eq.s32.totalorder %s43, 1
      %p118 = por %p116, %p117
      %p120 = scmp.ne.s32.totalorder %s103, %s119
      %p121 = scmp.eq.s32.totalorder %s43, 0
      %p122 = por %p120, %p121
      %s123 = ssub.s32 %s37, %s44
      %p124 = scmp.eq.s32.totalorder %s123, 0
      %s126 = sadd.s32 %s125, 1
      %s127 = scalar_select %p124, %s125, %s126
      %p130 = pneg %p124
      %p131 = scmp.eq.s32.totalorder %s37, 1
      %p132 = por %p130, %p131
      %p133 = scmp.ne.s32.totalorder %s125, %s128
      %p134 = scmp.eq.s32.totalorder %s37, 0
      %p135 = por %p133, %p134
      %p136 = scmp.ne.s32.totalorder %s125, %s128
      %p137 = scmp.eq.s32.totalorder %s42, 1
      %p138 = por %p136, %p137
      %p139 = scmp.ne.s32.totalorder %s128, %s129
      %p140 = scmp.eq.s32.totalorder %s42, 0
      %p141 = por %p139, %p140
      %p142 = scmp.ne.s32.totalorder %s128, %s129
      %p143 = scmp.eq.s32.totalorder %s43, 1
      %p144 = por %p142, %p143
      %p146 = scmp.ne.s32.totalorder %s129, %s145
      %p147 = scmp.eq.s32.totalorder %s43, 0
      %p148 = por %p146, %p147
      %s149 = ssub.s32 %s37, %s44
      %p150 = scmp.eq.s32.totalorder %s149, 0
      %s152 = sadd.s32 %s151, 1
      %s153 = scalar_select %p150, %s151, %s152
      %p156 = pneg %p150
      %p157 = scmp.eq.s32.totalorder %s37, 1
      %p158 = por %p156, %p157
      %p159 = scmp.ne.s32.totalorder %s151, %s154
      %p160 = scmp.eq.s32.totalorder %s37, 0
      %p161 = por %p159, %p160
      %p162 = scmp.ne.s32.totalorder %s151, %s154
      %p163 = scmp.eq.s32.totalorder %s42, 1
      %p164 = por %p162, %p163
      %p165 = scmp.ne.s32.totalorder %s154, %s155
      %p166 = scmp.eq.s32.totalorder %s42, 0
      %p167 = por %p165, %p166
      %p168 = scmp.ne.s32.totalorder %s154, %s155
      %p169 = scmp.eq.s32.totalorder %s43, 1
      %p170 = por %p168, %p169
      %p172 = scmp.ne.s32.totalorder %s155, %s171
      %p173 = scmp.eq.s32.totalorder %s43, 0
      %p174 = por %p172, %p173
      %s175 = ssub.s32 %s37, %s44
      %p176 = scmp.eq.s32.totalorder %s175, 0
      %s178 = sadd.s32 %s177, 1
      %s179 = scalar_select %p176, %s177, %s178
      %p182 = pneg %p176
      %p183 = scmp.eq.s32.totalorder %s37, 1
      %p184 = por %p182, %p183
      %p185 = scmp.ne.s32.totalorder %s177, %s180
      %p186 = scmp.eq.s32.totalorder %s37, 0
      %p187 = por %p185, %p186
      %p188 = scmp.ne.s32.totalorder %s177, %s180
      %p189 = scmp.eq.s32.totalorder %s42, 1
      %p190 = por %p188, %p189
      %p191 = scmp.ne.s32.totalorder %s180, %s181
      %p192 = scmp.eq.s32.totalorder %s42, 0
      %p193 = por %p191, %p192
      %p194 = scmp.ne.s32.totalorder %s180, %s181
      %p195 = scmp.eq.s32.totalorder %s43, 1
      %p196 = por %p194, %p195
      %p198 = scmp.ne.s32.totalorder %s181, %s197
      %p199 = scmp.eq.s32.totalorder %s43, 0
      %p200 = por %p198, %p199
      %s202 = sadd.s32 %s201, 1
      %p205 = scmp.eq.s32.totalorder %s37, 1
      %p206 = scmp.ne.s32.totalorder %s201, %s203
      %p207 = scmp.eq.s32.totalorder %s37, 0
      %p208 = por %p206, %p207
      %p209 = scmp.ne.s32.totalorder %s201, %s203
      %p210 = scmp.eq.s32.totalorder %s42, 1
      %p211 = por %p209, %p210
      %p212 = scmp.ne.s32.totalorder %s203, %s204
      %p213 = scmp.eq.s32.totalorder %s42, 0
      %p214 = por %p212, %p213
      %p215 = scmp.ne.s32.totalorder %s203, %s204
      %p216 = scmp.eq.s32.totalorder %s43, 1
      %p217 = por %p215, %p216
      %p219 = scmp.ne.s32.totalorder %s204, %s218
      %p220 = scmp.eq.s32.totalorder %s43, 0
      %p221 = por %p219, %p220
      %s223 = sadd.s32 %s222, 1
      %p226 = scmp.eq.s32.totalorder %s37, 1
      %p227 = scmp.ne.s32.totalorder %s222, %s224
      %p228 = scmp.eq.s32.totalorder %s37, 0
      %p229 = por %p227, %p228
      %p230 = scmp.ne.s32.totalorder %s222, %s224
      %p231 = scmp.eq.s32.totalorder %s42, 1
      %p232 = por %p230, %p231
      %p233 = scmp.ne.s32.totalorder %s224, %s225
      %p234 = scmp.eq.s32.totalorder %s42, 0
      %p235 = por %p233, %p234
      %p236 = scmp.ne.s32.totalorder %s224, %s225
      %p237 = scmp.eq.s32.totalorder %s43, 1
      %p238 = por %p236, %p237
      %p240 = scmp.ne.s32.totalorder %s225, %s239
      %p241 = scmp.eq.s32.totalorder %s43, 0
      %p242 = por %p240, %p241
      %s244 = sadd.s32 %s243, 1
      %p247 = scmp.eq.s32.totalorder %s37, 1
      %p248 = scmp.ne.s32.totalorder %s243, %s245
      %p249 = scmp.eq.s32.totalorder %s37, 0
      %p250 = por %p248, %p249
      %p251 = scmp.ne.s32.totalorder %s243, %s245
      %p252 = scmp.eq.s32.totalorder %s42, 1
      %p253 = por %p251, %p252
      %p254 = scmp.ne.s32.totalorder %s245, %s246
      %p255 = scmp.eq.s32.totalorder %s42, 0
      %p256 = por %p254, %p255
      %p257 = scmp.ne.s32.totalorder %s245, %s246
      %p258 = scmp.eq.s32.totalorder %s43, 1
      %p259 = por %p257, %p258
      %p261 = scmp.ne.s32.totalorder %s246, %s260
      %p262 = scmp.eq.s32.totalorder %s43, 0
      %p263 = por %p261, %p262
      %s265 = sadd.s32 %s264, 1
      %p268 = scmp.eq.s32.totalorder %s37, 1
      %p269 = scmp.ne.s32.totalorder %s264, %s266
      %p270 = scmp.eq.s32.totalorder %s37, 0
      %p271 = por %p269, %p270
      %p272 = scmp.ne.s32.totalorder %s264, %s266
      %p273 = scmp.eq.s32.totalorder %s42, 1
      %p274 = por %p272, %p273
      %p275 = scmp.ne.s32.totalorder %s266, %s267
      %p276 = scmp.eq.s32.totalorder %s42, 0
      %p277 = por %p275, %p276
      %p278 = scmp.ne.s32.totalorder %s266, %s267
      %p279 = scmp.eq.s32.totalorder %s43, 1
      %p280 = por %p278, %p279
      %p282 = scmp.ne.s32.totalorder %s267, %s281
      %p283 = scmp.eq.s32.totalorder %s43, 0
      %p284 = por %p282, %p283
      %s286 = sadd.s32 %s285, 1
      %p289 = scmp.eq.s32.totalorder %s37, 1
      %p290 = scmp.ne.s32.totalorder %s285, %s287
      %p291 = scmp.eq.s32.totalorder %s37, 0
      %p292 = por %p290, %p291
      %p293 = scmp.ne.s32.totalorder %s285, %s287
      %p294 = scmp.eq.s32.totalorder %s42, 1
      %p295 = por %p293, %p294
      %p296 = scmp.ne.s32.totalorder %s287, %s288
      %p297 = scmp.eq.s32.totalorder %s42, 0
      %p298 = por %p296, %p297
      %p299 = scmp.ne.s32.totalorder %s287, %s288
      %p300 = scmp.eq.s32.totalorder %s43, 1
      %p301 = por %p299, %p300
      %p303 = scmp.ne.s32.totalorder %s288, %s302
      %p304 = scmp.eq.s32.totalorder %s43, 0
      %p305 = por %p303, %p304
      %s307 = sadd.s32 %s306, 1
      %p310 = scmp.eq.s32.totalorder %s37, 1
      %p311 = scmp.ne.s32.totalorder %s306, %s308
      %p312 = scmp.eq.s32.totalorder %s37, 0
      %p313 = por %p311, %p312
      %p314 = scmp.ne.s32.totalorder %s306, %s308
      %p315 = scmp.eq.s32.totalorder %s42, 1
      %p316 = por %p314, %p315
      %p317 = scmp.ne.s32.totalorder %s308, %s309
      %p318 = scmp.eq.s32.totalorder %s42, 0
      %p319 = por %p317, %p318
      %p320 = scmp.ne.s32.totalorder %s308, %s309
      %p321 = scmp.eq.s32.totalorder %s43, 1
      %p322 = por %p320, %p321
      %p324 = scmp.ne.s32.totalorder %s309, %s323
      %p325 = scmp.eq.s32.totalorder %s43, 0
      %p326 = por %p324, %p325
      %s328 = sadd.s32 %s327, 1
      %p331 = scmp.eq.s32.totalorder %s37, 1
      %p332 = scmp.ne.s32.totalorder %s327, %s329
      %p333 = scmp.eq.s32.totalorder %s37, 0
      %p334 = por %p332, %p333
      %p335 = scmp.ne.s32.totalorder %s327, %s329
      %p336 = scmp.eq.s32.totalorder %s42, 1
      %p337 = por %p335, %p336
      %p338 = scmp.ne.s32.totalorder %s329, %s330
      %p339 = scmp.eq.s32.totalorder %s42, 0
      %p340 = por %p338, %p339
      %p341 = scmp.ne.s32.totalorder %s329, %s330
      %p342 = scmp.eq.s32.totalorder %s43, 1
      %p343 = por %p341, %p342
      %p345 = scmp.ne.s32.totalorder %s330, %s344
      %p346 = scmp.eq.s32.totalorder %s43, 0
      %p347 = por %p345, %p346
      %s348 = ssub.s32 %s37, %s44
      %p349 = scmp.eq.s32.totalorder %s348, 0
      %s351 = sadd.s32 %s350, 1
      %s352 = scalar_select %p349, %s350, %s351
      %p355 = pneg %p349
      %p356 = scmp.eq.s32.totalorder %s37, 1
      %p357 = por %p355, %p356
      %p358 = scmp.ne.s32.totalorder %s350, %s353
      %p359 = scmp.eq.s32.totalorder %s37, 0
      %p360 = por %p358, %p359
      %p361 = scmp.ne.s32.totalorder %s350, %s353
      %p362 = scmp.eq.s32.totalorder %s42, 1
      %p363 = por %p361, %p362
      %p364 = scmp.ne.s32.totalorder %s353, %s354
      %p365 = scmp.eq.s32.totalorder %s42, 0
      %p366 = por %p364, %p365
      %p367 = scmp.ne.s32.totalorder %s353, %s354
      %p368 = scmp.eq.s32.totalorder %s43, 1
      %p369 = por %p367, %p368
      %p371 = scmp.ne.s32.totalorder %s354, %s370
      %p372 = scmp.eq.s32.totalorder %s43, 0
      %p373 = por %p371, %p372
      %s374 = ssub.s32 %s37, %s44
      %p375 = scmp.eq.s32.totalorder %s374, 0
      %s377 = sadd.s32 %s376, 1
      %s378 = scalar_select %p375, %s376, %s377
      %p381 = pneg %p375
      %p382 = scmp.eq.s32.totalorder %s37, 1
      %p383 = por %p381, %p382
      %p384 = scmp.ne.s32.totalorder %s376, %s379
      %p385 = scmp.eq.s32.totalorder %s37, 0
      %p386 = por %p384, %p385
      %p387 = scmp.ne.s32.totalorder %s376, %s379
      %p388 = scmp.eq.s32.totalorder %s42, 1
      %p389 = por %p387, %p388
      %p390 = scmp.ne.s32.totalorder %s379, %s380
      %p391 = scmp.eq.s32.totalorder %s42, 0
      %p392 = por %p390, %p391
      %p393 = scmp.ne.s32.totalorder %s379, %s380
      %p394 = scmp.eq.s32.totalorder %s43, 1
      %p395 = por %p393, %p394
      %p397 = scmp.ne.s32.totalorder %s380, %s396
      %p398 = scmp.eq.s32.totalorder %s43, 0
      %p399 = por %p397, %p398
      %p400 = scmp.le.s32.totalorder 1, %s37
      %p401 = scmp.lt.s32.totalorder %s37, 3
      %p402 = pnand %p400, %p401
      %p403 = pneg %p402
      // Predicated region
      $region9: #{tpu_custom_call.1} parent=5 // pred_check
        _
      $region10: #{tpu_custom_call.1} parent=5 // pred_check_branch
        %405 = sbr.rel (%p402) target = $region12
      $region11: #{tpu_custom_call.1} parent=5 // pred_region
        %s406 = ssub.s32 %s37, 1
        // Predicated region
        $region13: #{tpu_custom_call.1} parent=11 // pred_check
          %p407 = pneg %p214
        $region14: #{tpu_custom_call.1} parent=11 // pred_check_branch
          %409 = sbr.rel (%p407) target = $region16
        $region15: #{tpu_custom_call.1} parent=11 // pred_region
          %411 = vsyncadd [#allocation9], 0
          %s412 = sshll.u32 %s6, 4
          %s413 = int_to_ptr.hbm [resolvable:$true] %s412
          %s414 = sshll.u32 [#allocation10], 4
          %s415 = int_to_ptr.vmem [resolvable:$true] %s414
          %420 = dma.hbm_to_vmem [thread:$0]  %s413, 512, %s415, [#allocation9], 128, 128, 8
        $region16: #{tpu_custom_call.1} parent=11 // pred_fallthru
          _
        // Predicated region
        $region17: #{tpu_custom_call.1} parent=11 // pred_check
          %p421 = pneg %p235
        $region18: #{tpu_custom_call.1} parent=11 // pred_check_branch
          %423 = sbr.rel (%p421) target = $region20
        $region19: #{tpu_custom_call.1} parent=11 // pred_region
          _
        $region20: #{tpu_custom_call.1} parent=11 // pred_fallthru
          _
        // Predicated region
        $region21: #{tpu_custom_call.1} parent=11 // pred_check
          %p424 = pneg %p256
        $region22: #{tpu_custom_call.1} parent=11 // pred_check_branch
          %426 = sbr.rel (%p424) target = $region24
        $region23: #{tpu_custom_call.1} parent=11 // pred_region
          _
        $region24: #{tpu_custom_call.1} parent=11 // pred_fallthru
          _
        // Predicated region
        $region25: #{tpu_custom_call.1} parent=11 // pred_check
          %p427 = pneg %p277
        $region26: #{tpu_custom_call.1} parent=11 // pred_check_branch
          %429 = sbr.rel (%p427) target = $region28
        $region27: #{tpu_custom_call.1} parent=11 // pred_region
          _
        $region28: #{tpu_custom_call.1} parent=11 // pred_fallthru
          _
        // Predicated region
        $region29: #{tpu_custom_call.1} parent=11 // pred_check
          %p430 = pneg %p298
        $region30: #{tpu_custom_call.1} parent=11 // pred_check_branch
          %432 = sbr.rel (%p430) target = $region32
        $region31: #{tpu_custom_call.1} parent=11 // pred_region
          _
        $region32: #{tpu_custom_call.1} parent=11 // pred_fallthru
          _
        // Predicated region
        $region33: #{tpu_custom_call.1} parent=11 // pred_check
          %p433 = pneg %p319
        $region34: #{tpu_custom_call.1} parent=11 // pred_check_branch
          %435 = sbr.rel (%p433) target = $region36
        $region35: #{tpu_custom_call.1} parent=11 // pred_region
          %437 = vsyncadd [#allocation12], 0
          %s439 = sshll.u32 %s11, 4
          %s440 = int_to_ptr.hbm [resolvable:$true] %s439
          %s441 = sshll.u32 [#allocation11], 4
          %s442 = int_to_ptr.vmem [resolvable:$true] %s441
          %444 = dma.hbm_to_vmem [thread:$0]  %s440, 16, %s442, [#allocation12]
        $region36: #{tpu_custom_call.1} parent=11 // pred_fallthru
          _
        // Predicated region
        $region37: #{tpu_custom_call.1} parent=11 // pred_check
          %p445 = pneg %p340
        $region38: #{tpu_custom_call.1} parent=11 // pred_check_branch
          %447 = sbr.rel (%p445) target = $region40
        $region39: #{tpu_custom_call.1} parent=11 // pred_region
          _
        $region40: #{tpu_custom_call.1} parent=11 // pred_fallthru
          _
      $region12: #{tpu_custom_call.1} parent=5 // pred_fallthru
        _
      %p448 = scmp.lt.s32.totalorder %s37, 2
      // Predicated region
      $region41: #{tpu_custom_call.1} parent=5 // pred_check
        %p449 = pneg %p448
      $region42: #{tpu_custom_call.1} parent=5 // pred_check_branch
        %451 = sbr.rel (%p449) target = $region44
      $region43: #{tpu_custom_call.1} parent=5 // pred_region
        // Predicated region
        $region45: #{tpu_custom_call.1} parent=43 // pred_check
          %p452 = pneg %p57
        $region46: #{tpu_custom_call.1} parent=43 // pred_check_branch
          %454 = sbr.rel (%p452) target = $region48
        $region47: #{tpu_custom_call.1} parent=43 // pred_region
          %s455 = sand.u32 %s47, 1
          %s456 = scalar_lea.sflag [#allocation3], %s455
          %s457 = sand.u32 %s47, 1
          %s458 = scalar_lea.vmem [#allocation2], %s457
          %460 = vsyncadd %s456, 0
          %s461 = scalar_lea.hbm %s0, %s37
          %s463 = sshll.u32 %s461, 4
          %s464 = int_to_ptr.hbm [resolvable:$true] %s463
          %s465 = sshll.u32 %s458, 4
          %s466 = int_to_ptr.vmem [resolvable:$true] %s465
          %468 = dma.hbm_to_vmem [thread:$0]  %s464, 16, %s466, %s456
        $region48: #{tpu_custom_call.1} parent=43 // pred_fallthru
          _
        // Predicated region
        $region49: #{tpu_custom_call.1} parent=43 // pred_check
          %p469 = pneg %p83
        $region50: #{tpu_custom_call.1} parent=43 // pred_check_branch
          %471 = sbr.rel (%p469) target = $region52
        $region51: #{tpu_custom_call.1} parent=43 // pred_region
          %p472 = scmp.lt.s32.totalorder %s37, 1
          %s473 = scalar_select %p472, %s37, 1
          %s474 = smul.addr %s473, 16
          %s475 = smul.addr %s474, 4
          %s476 = scalar_lea.vmem %s1, %s475
        $region52: #{tpu_custom_call.1} parent=43 // pred_fallthru
          _
        // Predicated region
        $region53: #{tpu_custom_call.1} parent=43 // pred_check
          %p477 = pneg %p109
        $region54: #{tpu_custom_call.1} parent=43 // pred_check_branch
          %479 = sbr.rel (%p477) target = $region56
        $region55: #{tpu_custom_call.1} parent=43 // pred_region
          %s480 = sand.u32 %s37, 1
          %s481 = scalar_lea.sflag [#allocation6], %s480
          %s482 = sand.u32 %s99, 1
          %s483 = scalar_lea.vmem [#allocation5], %s482
          %485 = vsyncadd %s481, 0
          %s486 = scalar_lea.hbm %s2, %s37
          %s488 = sshll.u32 %s486, 4
          %s489 = int_to_ptr.hbm [resolvable:$true] %s488
          %s490 = sshll.u32 %s483, 4
          %s491 = int_to_ptr.vmem [resolvable:$true] %s490
          %493 = dma.hbm_to_vmem [thread:$0]  %s489, 16, %s491, %s481
        $region56: #{tpu_custom_call.1} parent=43 // pred_fallthru
          _
        // Predicated region
        $region57: #{tpu_custom_call.1} parent=43 // pred_check
          %p494 = pneg %p135
        $region58: #{tpu_custom_call.1} parent=43 // pred_check_branch
          %496 = sbr.rel (%p494) target = $region60
        $region59: #{tpu_custom_call.1} parent=43 // pred_region
          %s497 = sand.u32 %s37, 1
          %s498 = scalar_lea.sflag [#allocation6], %s497
          %s499 = sand.u32 %s125, 1
          %s500 = scalar_lea.vmem [#allocation7], %s499
          %502 = vsyncadd %s498, 0
          %s503 = scalar_lea.hbm %s3, %s37
          %s505 = sshll.u32 %s503, 4
          %s506 = int_to_ptr.hbm [resolvable:$true] %s505
          %s507 = sshll.u32 %s500, 4
          %s508 = int_to_ptr.vmem [resolvable:$true] %s507
          %510 = dma.hbm_to_vmem [thread:$0]  %s506, 16, %s508, %s498
        $region60: #{tpu_custom_call.1} parent=43 // pred_fallthru
          _
        // Predicated region
        $region61: #{tpu_custom_call.1} parent=43 // pred_check
          %p511 = pneg %p161
        $region62: #{tpu_custom_call.1} parent=43 // pred_check_branch
          %513 = sbr.rel (%p511) target = $region64
        $region63: #{tpu_custom_call.1} parent=43 // pred_region
          %p514 = scmp.lt.s32.totalorder %s37, 1
          %s515 = scalar_select %p514, %s37, 1
          %s516 = smul.addr %s515, 2
          %s517 = smul.addr %s516, 8
          %s518 = scalar_lea.vmem %s4, %s517
        $region64: #{tpu_custom_call.1} parent=43 // pred_fallthru
          _
        // Predicated region
        $region65: #{tpu_custom_call.1} parent=43 // pred_check
          %p519 = pneg %p187
        $region66: #{tpu_custom_call.1} parent=43 // pred_check_branch
          %521 = sbr.rel (%p519) target = $region68
        $region67: #{tpu_custom_call.1} parent=43 // pred_region
          %s522 = sand.u32 %s37, 1
          %s523 = scalar_lea.sflag [#allocation9], %s522
          %s524 = sand.u32 %s177, 1
          %s525 = scalar_lea.vmem [#allocation8], %s524
          %527 = vsyncadd %s523, 0
          %s528 = scalar_lea.hbm %s5, %s37
          %s530 = sshll.u32 %s528, 4
          %s531 = int_to_ptr.hbm [resolvable:$true] %s530
          %s532 = sshll.u32 %s525, 4
          %s533 = int_to_ptr.vmem [resolvable:$true] %s532
          %535 = dma.hbm_to_vmem [thread:$0]  %s531, 16, %s533, %s523
        $region68: #{tpu_custom_call.1} parent=43 // pred_fallthru
          _
      $region44: #{tpu_custom_call.1} parent=5 // pred_fallthru
        _
      %p536 = scmp.le.s32.totalorder 1, %s37
      %p537 = scmp.lt.s32.totalorder %s37, 3
      %p538 = pnand %p536, %p537
      %p539 = pneg %p538
      // Predicated region
      $region69: #{tpu_custom_call.1} parent=5 // pred_check
        _
      $region70: #{tpu_custom_call.1} parent=5 // pred_check_branch
        %541 = sbr.rel (%p538) target = $region72
      $region71: #{tpu_custom_call.1} parent=5 // pred_region
        %s542 = ssub.s32 %s37, 1
        %s543 = sand.u32 %s50, 1
        %s544 = scalar_lea.sflag [#allocation3], %s543
        %s545 = sand.u32 %s50, 1
        %s546 = scalar_lea.vmem [#allocation2], %s545
        // Predicated region
        $region73: #{tpu_custom_call.1} parent=71 // pred_check
          %p547 = pneg %p63
        $region74: #{tpu_custom_call.1} parent=71 // pred_check_branch
          %549 = sbr.rel (%p547) target = $region76
        $region75: #{tpu_custom_call.1} parent=71 // pred_region
          %551 = dma.done %s544, 16
        $region76: #{tpu_custom_call.1} parent=71 // pred_fallthru
          _
        %s552 = sand.u32 %s42, 1
        %s553 = scalar_lea.sflag [#allocation6], %s552
        %s554 = sand.u32 %s102, 1
        %s555 = scalar_lea.vmem [#allocation5], %s554
        // Predicated region
        $region77: #{tpu_custom_call.1} parent=71 // pred_check
          %p556 = pneg %p115
        $region78: #{tpu_custom_call.1} parent=71 // pred_check_branch
          %558 = sbr.rel (%p556) target = $region80
        $region79: #{tpu_custom_call.1} parent=71 // pred_region
          %560 = dma.done %s553, 16
        $region80: #{tpu_custom_call.1} parent=71 // pred_fallthru
          _
        %s561 = sand.u32 %s42, 1
        %s562 = scalar_lea.sflag [#allocation6], %s561
        %s563 = sand.u32 %s128, 1
        %s564 = scalar_lea.vmem [#allocation7], %s563
        // Predicated region
        $region81: #{tpu_custom_call.1} parent=71 // pred_check
          %p565 = pneg %p141
        $region82: #{tpu_custom_call.1} parent=71 // pred_check_branch
          %567 = sbr.rel (%p565) target = $region84
        $region83: #{tpu_custom_call.1} parent=71 // pred_region
          %569 = dma.done %s562, 16
        $region84: #{tpu_custom_call.1} parent=71 // pred_fallthru
          _
        %s570 = sand.u32 %s42, 1
        %s571 = scalar_lea.sflag [#allocation9], %s570
        %s572 = sand.u32 %s180, 1
        %s573 = scalar_lea.vmem [#allocation8], %s572
        // Predicated region
        $region85: #{tpu_custom_call.1} parent=71 // pred_check
          %p574 = pneg %p193
        $region86: #{tpu_custom_call.1} parent=71 // pred_check_branch
          %576 = sbr.rel (%p574) target = $region88
        $region87: #{tpu_custom_call.1} parent=71 // pred_region
          %578 = dma.done %s571, 16
        $region88: #{tpu_custom_call.1} parent=71 // pred_fallthru
          _
        // Predicated region
        $region89: #{tpu_custom_call.1} parent=71 // pred_check
          %p579 = pneg %p214
        $region90: #{tpu_custom_call.1} parent=71 // pred_check_branch
          %581 = sbr.rel (%p579) target = $region92
        $region91: #{tpu_custom_call.1} parent=71 // pred_region
          %583 = dma.done [#allocation9], 512
        $region92: #{tpu_custom_call.1} parent=71 // pred_fallthru
          _
        // Predicated region
        $region93: #{tpu_custom_call.1} parent=71 // pred_check
          %p584 = pneg %p319
        $region94: #{tpu_custom_call.1} parent=71 // pred_check_branch
          %586 = sbr.rel (%p584) target = $region96
        $region95: #{tpu_custom_call.1} parent=71 // pred_region
          %588 = dma.done [#allocation12], 16
        $region96: #{tpu_custom_call.1} parent=71 // pred_fallthru
          _
        %s589 = sand.u32 %s50, 1
        %s590 = scalar_lea.sflag [#allocation3], %s589
        %s591 = sand.u32 %s50, 1
        %s592 = scalar_lea.vmem [#allocation2], %s591
        %p593 = pneg %p63
        %p594 = pneg %p60
        %p595 = scmp.lt.s32.totalorder %s42, 1
        %s596 = scalar_select %p595, %s42, 1
        %s597 = smul.addr %s596, 16
        %s598 = smul.addr %s597, 4
        %s599 = scalar_lea.vmem %s1, %s598
        %p600 = pneg %p89
        %p601 = pneg %p86
        %s602 = sand.u32 %s42, 1
        %s603 = scalar_lea.sflag [#allocation6], %s602
        %s604 = sand.u32 %s102, 1
        %s605 = scalar_lea.vmem [#allocation5], %s604
        %p606 = pneg %p115
        %p607 = pneg %p112
        %s608 = sand.u32 %s42, 1
        %s609 = scalar_lea.sflag [#allocation6], %s608
        %s610 = sand.u32 %s128, 1
        %s611 = scalar_lea.vmem [#allocation7], %s610
        %p612 = pneg %p141
        %p613 = pneg %p138
        %p614 = scmp.lt.s32.totalorder %s42, 1
        %s615 = scalar_select %p614, %s42, 1
        %s616 = smul.addr %s615, 2
        %s617 = smul.addr %s616, 8
        %s618 = scalar_lea.vmem %s4, %s617
        %p619 = pneg %p167
        %p620 = pneg %p164
        %s621 = sand.u32 %s42, 1
        %s622 = scalar_lea.sflag [#allocation9], %s621
        %s623 = sand.u32 %s180, 1
        %s624 = scalar_lea.vmem [#allocation8], %s623
        %p625 = pneg %p193
        %p626 = pneg %p190
        %p627 = pneg %p214
        %p628 = pneg %p211
        %p629 = pneg %p235
        %p630 = pneg %p232
        %p631 = pneg %p256
        %p632 = pneg %p253
        %p633 = pneg %p277
        %p634 = pneg %p274
        %p635 = pneg %p298
        %p636 = pneg %p295
        %p637 = pneg %p319
        %p638 = pneg %p316
        %p639 = pneg %p340
        %p640 = pneg %p337
        %p641 = pneg %p366
        %p642 = pneg %p363
        %s643 = sand.u32 %s353, 1
        %s644 = scalar_lea.sflag [#allocation4], %s643
        %s645 = sand.u32 %s353, 1
        %s646 = smul.addr %s645, 16
        %s647 = scalar_lea.vmem [#allocation13], %s646
        %p648 = pneg %p392
        %p649 = pneg %p389
        %s650 = sand.u32 %s379, 1
        %s651 = scalar_lea.sflag [#allocation15], %s650
        %s652 = sand.u32 %s379, 1
        %s653 = scalar_lea.vmem [#allocation14], %s652
        %p654 = scmp.lt.s32.totalorder %s42, 1
        %s655 = scalar_select %p654, %s42, 1
        %s656 = smul.addr %s655, 16
        %s657 = smul.addr %s656, 4
        %s658 = scalar_lea.vmem %s1, %s657
        %p659 = scmp.lt.s32.totalorder %s42, 1
        %s660 = scalar_select %p659, %s42, 1
        %s661 = smul.addr %s660, 2
        %s662 = smul.addr %s661, 8
        %s663 = scalar_lea.vmem %s4, %s662
        %v665 = vld [vmem:[%s546] sm:$0x1]
        %v666 = vld [vmem:[%s555] sm:$0x1]
        %v667 = vld [vmem:[%s564] sm:$0x1]
        %v668 = vld [vmem:[%s573] sm:$0x1]
        %v669 = vld [vmem:[%s12] sm:$0xff]
        %v670 = vld [vmem:[%s8] sm:$0x7]
        %v671 = vld [vmem:[%s9] sm:$0x7]
        %vm672 = vcmask 64512
        %v674 = vsel %vm672, %v668, 0
        %676 = vmatpush.msra.mxu0 0.0
        %677 = vmatpush.msra.mxu0 0.0
        %678 = vmatpush.msra.mxu0 0.0
        %679 = vmatpush.msra.mxu0 0.0
        %680 = vmatpush.msra.mxu0 0.0
        %681 = vmatpush.msra.mxu0 0.0
        %682 = vmatpush.msra.mxu0 0.0
        %683 = vmatpush.msra.mxu0 0.0
        %684 = vmatpush.msra.mxu0 0.0
        %685 = vmatpush.msra.mxu0 0.0
        %686 = vmatpush.msra.mxu0 0.0
        %687 = vmatpush.msra.mxu0 0.0
        %688 = vmatpush.msra.mxu0 0.0
        %689 = vmatpush.msra.mxu0 0.0
        %690 = vmatpush.msra.mxu0 0.0
        %691 = vmatpush.msra.mxu0 %v669
        %692 = vmatmul.f32.gmra.mxu0 %v674
        %v693 = vpop.f32.mrf.mxu0
        %v694 = vadd.f32 0.0, %v693
        %695 = vdwg.mxu0
        %v696 = vsub.f32 1.0, %v694
        %v697 = vld [vmem:[#allocation10] sm:$0xff]
        %v698 = vld [vmem:[#allocation10 + $0x8] sm:$0xff]
        %v699 = vld [vmem:[#allocation10 + $0x10] sm:$0xff]
        %v700 = vld [vmem:[#allocation10 + $0x18] sm:$0xff]
        %v701 = vld [vmem:[%s7] sm:$0x1]
        %vm702 = vcmask 261120
        %v704 = vsel %vm702, %v665, 0
        %706 = vmatpush.msra.mxu0 0.0
        %707 = vmatpush.msra.mxu0 0.0
        %708 = vmatpush.msra.mxu0 0.0
        %709 = vmatpush.msra.mxu0 0.0
        %710 = vmatpush.msra.mxu0 0.0
        %711 = vmatpush.msra.mxu0 0.0
        %712 = vmatpush.msra.mxu0 0.0
        %713 = vmatpush.msra.mxu0 0.0
        %714 = vmatpush.msra.mxu0 0.0
        %715 = vmatpush.msra.mxu0 0.0
        %716 = vmatpush.msra.mxu0 0.0
        %717 = vmatpush.msra.mxu0 0.0
        %718 = vmatpush.msra.mxu0 %v700
        %719 = vmatpush.msra.mxu0 %v699
        %720 = vmatpush.msra.mxu0 %v698
        %721 = vmatpush.msra.mxu0 %v697
        %722 = vmatmul.f32.gmra.mxu0 %v704
        %v723 = vpop.f32.mrf.mxu0
        %v724 = vadd.f32 %v701, %v723
        %725 = vdwg.mxu0
        %v726 = vmul.f32 %v694, %v694
        %vm727 = vcmask 57344
        %v728 = vsel %vm727, %v726, 0.0
        %729 = vadd.xlane.f32.xlu0 %v728
        %v730 = vpop.xlane.xlu0 %729
        %732 = vrot.lane.b32.xlu0 %v694, 16
        %v733 = vpop.permute.xlu0 %732
        %v735 = vmul.f32 %v694, %v733
        %737 = vrot.lane.b32.xlu0 %v735, 112
        %v738 = vpop.permute.xlu0 %737
        %v740 = vsel %vm727, %v738, 0.0
        %741 = vadd.xlane.f32.xlu0 %v740
        %v742 = vpop.xlane.xlu0 %741
        %v743 = vmul.f32 %v694, %v696
        %745 = vrot.lane.b32.xlu0 %v696, 16
        %v746 = vpop.permute.xlu0 %745
        %v748 = vmul.f32 %v694, %v746
        %750 = vrot.lane.b32.xlu0 %v666, 126
        %v751 = vpop.permute.xlu0 %750
        %v753 = vadd.f32 %v666, %v751
        %754 = vrot.lane.b32.xlu0 %v666, 121
        %v755 = vpop.permute.xlu0 %754
        %v757 = vadd.f32 %v753, %v755
        %759 = vset.pattern.permute.xlu0 0
        %760 = vperm.xlu0 %759, %v757
        %v761 = vpop.permute.xlu0 %760
        %v763 = vperm.slane %v761, 0
        %v764 = vmul.f32 %v763, %v668
        %765 = vrot.lane.b32.xlu0 %v666, 123
        %v766 = vpop.permute.xlu0 %765
        %v768 = vadd.f32 %v666, %v766
        %770 = vset.pattern.permute.xlu0 1
        %771 = vperm.xlu0 %770, %v768
        %v772 = vpop.permute.xlu0 %771
        %v774 = vperm.slane %v772, 0
        %v775 = vmul.f32 %v774, %v694
        %v776 = vadd.f32 %v764, %v775
        %777 = vrot.lane.b32.xlu0 %v666, 127
        %v778 = vpop.permute.xlu0 %777
        %v780 = vadd.f32 %v666, %v778
        %781 = vrot.lane.b32.xlu0 %v666, 124
        %v782 = vpop.permute.xlu0 %781
        %v784 = vadd.f32 %v780, %v782
        %786 = vset.pattern.permute.xlu0 4
        %787 = vperm.xlu0 %786, %v784
        %v788 = vpop.permute.xlu0 %787
        %v790 = vperm.slane %v788, 0
        %v791 = vmul.f32 %v790, %v694
        %793 = vrot.lane.b32.xlu0 %v791, 120
        %v794 = vpop.permute.xlu0 %793
        %v796 = vadd.f32 %v776, %v794
        %797 = vset.pattern.permute.xlu0 3
        %798 = vperm.xlu0 %797, %v666
        %v799 = vpop.permute.xlu0 %798
        %v801 = vperm.slane %v799, 0
        %v802 = vmul.f32 %v801, %v694
        %804 = vrot.lane.b32.xlu0 %v802, 112
        %v805 = vpop.permute.xlu0 %804
        %v807 = vadd.f32 %v796, %v805
        %v808 = vsel %vm727, %v807, -inf
        %809 = vmax.xlane.f32.xlu0 %v808
        %v810 = vpop.xlane.xlu0 %809
        %v811 = vsub.f32 %v807, %v810
        %v812 = vmul.f32 %v811, 1.442695
        %v813 = vpow.pop %v812
        %v814 = vsel %vm727, %v813, 0.0
        %815 = vadd.xlane.f32.xlu0 %v814
        %v816 = vpop.xlane.xlu0 %815
        %v817 = vrcp.pop %v816
        %v818 = vmul.f32 %v813, %v817
        %819 = vset.pattern.permute.xlu0 0
        %820 = vperm.xlu0 %819, %v666
        %v821 = vpop.permute.xlu0 %820
        %v823 = vperm.slane %v821, 0
        %v824 = vmul.f32 %v774, %v696
        %v825 = vadd.f32 %v823, %v824
        %v826 = vsub.f32 1.0, %v668
        %827 = vset.pattern.permute.xlu0 2
        %828 = vperm.xlu0 %827, %v768
        %v829 = vpop.permute.xlu0 %828
        %v831 = vperm.slane %v829, 0
        %v832 = vmul.f32 %v831, %v826
        %v833 = vadd.f32 %v825, %v832
        %v834 = vmul.f32 %v801, %v696
        %835 = vrot.lane.b32.xlu0 %v696, 112
        %v836 = vpop.permute.xlu0 %835
        %v838 = vmul.f32 %v834, %v836
        %v839 = vadd.f32 %v833, %v838
        %v840 = vmul.f32 %v790, %v696
        %842 = vrot.lane.b32.xlu0 %v840, 120
        %v843 = vpop.permute.xlu0 %842
        %v845 = vadd.f32 %v839, %v843
        %846 = vset.pattern.permute.xlu0 1
        %847 = vperm.xlu0 %846, %v666
        %v848 = vpop.permute.xlu0 %847
        %v850 = vperm.slane %v848, 0
        %v851 = vmul.f32 %v850, %v694
        %v852 = vmul.f32 %v802, %v836
        %v853 = vadd.f32 %v851, %v852
        %854 = vset.pattern.permute.xlu0 2
        %855 = vperm.xlu0 %854, %v666
        %v856 = vpop.permute.xlu0 %855
        %v858 = vperm.slane %v856, 0
        %v859 = vmul.f32 %v858, %v668
        %860 = vset.pattern.permute.xlu0 6
        %861 = vperm.xlu0 %860, %v666
        %v862 = vpop.permute.xlu0 %861
        %v864 = vperm.slane %v862, 0
        %v865 = vmul.f32 %v864, %v694
        %866 = vset.pattern.permute.xlu0 4
        %867 = vperm.xlu0 %866, %v666
        %v868 = vpop.permute.xlu0 %867
        %v870 = vperm.slane %v868, 0
        %v871 = vmul.f32 %v870, %v694
        %872 = vset.pattern.permute.xlu0 5
        %873 = vperm.xlu0 %872, %v666
        %v874 = vpop.permute.xlu0 %873
        %v876 = vperm.slane %v874, 0
        %v877 = vmul.f32 %v876, %v694
        %v878 = vld [vmem:[%s663] sm:$0xff]
        %v879 = vld [vmem:[%s663 + $0x8] sm:$0xff]
        %v880 = vld [vmem:[%s658] sm:$0xff]
        %v881 = vld [vmem:[%s658 + $0x8] sm:$0xff]
        %v882 = vld [vmem:[%s658 + $0x10] sm:$0xff]
        %v883 = vld [vmem:[%s658 + $0x18] sm:$0xff]
        %v884 = vld [vmem:[%s658 + $0x20] sm:$0xff]
        %v885 = vld [vmem:[%s658 + $0x28] sm:$0xff]
        %v886 = vld [vmem:[%s658 + $0x30] sm:$0xff]
        %v887 = vld [vmem:[%s658 + $0x38] sm:$0xff]
        %v888 = vrot.slane %v694, 7
        %889 = vrot.lane.b32.xlu0 %v888, 120
        %v890 = vpop.permute.xlu0 %889
        %v893 = vrot.slane %v743, 6
        %v896 = vrot.slane %v748, 5
        %897 = vrot.lane.b32.xlu0 %v896, 112
        %v898 = vpop.permute.xlu0 %897
        %vm900 = vcmask 1040384
        %v901 = vsel %vm900, %v668, %v890
        %vm902 = vcmask 1041408
        %v903 = vsel %vm902, %v901, %v893
        %vm904 = vcmask 1042432
        %v905 = vsel %vm904, %v903, %v898
        %v907 = vsel %vm672, %v905, 0
        %909 = vmatpush.msra.mxu0 0.0
        %910 = vmatpush.msra.mxu0 0.0
        %911 = vmatpush.msra.mxu0 0.0
        %912 = vmatpush.msra.mxu0 0.0
        %913 = vmatpush.msra.mxu0 0.0
        %914 = vmatpush.msra.mxu0 0.0
        %915 = vmatpush.msra.mxu0 0.0
        %916 = vmatpush.msra.mxu0 0.0
        %917 = vmatpush.msra.mxu0 0.0
        %918 = vmatpush.msra.mxu0 0.0
        %919 = vmatpush.msra.mxu0 0.0
        %920 = vmatpush.msra.mxu0 0.0
        %921 = vmatpush.msra.mxu0 0.0
        %922 = vmatpush.msra.mxu0 0.0
        %923 = vmatpush.msra.mxu0 0.0
        %924 = vmatpush.msra.mxu0 %v878
        %925 = vmatmul.f32.gmra.mxu0 %v907
        %v926 = vpop.f32.mrf.mxu0
        %v927 = vadd.f32 0.0, %v926
        %928 = vdwg.mxu0
        %929 = vmatpush.msra.mxu0 0.0
        %930 = vmatpush.msra.mxu0 0.0
        %931 = vmatpush.msra.mxu0 0.0
        %932 = vmatpush.msra.mxu0 0.0
        %933 = vmatpush.msra.mxu0 0.0
        %934 = vmatpush.msra.mxu0 0.0
        %935 = vmatpush.msra.mxu0 0.0
        %936 = vmatpush.msra.mxu0 0.0
        %937 = vmatpush.msra.mxu0 0.0
        %938 = vmatpush.msra.mxu0 0.0
        %939 = vmatpush.msra.mxu0 0.0
        %940 = vmatpush.msra.mxu0 0.0
        %941 = vmatpush.msra.mxu0 0.0
        %942 = vmatpush.msra.mxu0 0.0
        %943 = vmatpush.msra.mxu0 0.0
        %944 = vmatpush.msra.mxu0 %v879
        %945 = vmatmul.f32.gmra.mxu0 %v907
        %v946 = vpop.f32.mrf.mxu0
        %v947 = vadd.f32 0.0, %v946
        %948 = vdwg.mxu0
        %v949 = vsel %vm902, %v927, -inf
        %v950 = vsel %vm902, %v947, -inf
        %v951 = vmax.f32 %v949, %v950
        %952 = vmax.xlane.f32.xlu0 %v951
        %v953 = vpop.xlane.xlu0 %952
        %v954 = vsub.f32 %v927, %v953
        %v955 = vsub.f32 %v947, %v953
        %v956 = vmul.f32 %v954, 1.442695
        %v957 = vpow.pop %v956
        %v958 = vmul.f32 %v955, 1.442695
        %v959 = vpow.pop %v958
        %v960 = vsel %vm902, %v957, 0.0
        %v961 = vsel %vm902, %v959, 0.0
        %v962 = vadd.f32 %v960, %v961
        %963 = vadd.xlane.f32.xlu0 %v962
        %v964 = vpop.xlane.xlu0 %963
        %v965 = vrcp.pop %v964
        %v966 = vmul.f32 %v957, %v965
        %v967 = vmul.f32 %v959, %v965
        %v968 = vpack.c.bf16 %v966, %v966
        %v969 = vpack.c.bf16 %v967, %v967
        %v974 = vunpack.c.l.b16 %v880
        %v975 = vunpack.c.h.b16 %v880
        %v976 = vunpack.c.l.b16 %v881
        %v977 = vunpack.c.h.b16 %v881
        %v978 = vunpack.c.l.b16 %v882
        %v979 = vunpack.c.h.b16 %v882
        %v980 = vunpack.c.l.b16 %v883
        %v981 = vunpack.c.h.b16 %v883
        %v982 = vpack.c.b16 %v976, %v974
        %v983 = vpack.c.b16 %v977, %v975
        %v984 = vpack.c.b16 %v980, %v978
        %v985 = vpack.c.b16 %v981, %v979
        %990 = vmatpush.bf16.xpose.msra.mxu0 0
        %991 = vmatpush.bf16.xpose.msra.mxu0 0
        %992 = vmatpush.bf16.xpose.msra.mxu0 0
        %993 = vmatpush.bf16.xpose.msra.mxu0 0
        %994 = vmatpush.bf16.xpose.msra.mxu0 0
        %995 = vmatpush.bf16.xpose.msra.mxu0 0
        %996 = vmatpush.bf16.xpose.msra.mxu0 %v984
        %997 = vmatpush.bf16.xpose.msra.mxu0 %v982
        %998 = vmatmul.bf16.gmra.mxu0 %v968
        %v999 = vpop.f32.mrf.mxu0
        %v1000 = vadd.f32 0.0, %v999
        %v1001 = vpop.f32.mrf.mxu0
        %1002 = vdwg.mxu0
        %1003 = vmatpush.bf16.xpose.msra.mxu0 0
        %1004 = vmatpush.bf16.xpose.msra.mxu0 0
        %1005 = vmatpush.bf16.xpose.msra.mxu0 0
        %1006 = vmatpush.bf16.xpose.msra.mxu0 0
        %1007 = vmatpush.bf16.xpose.msra.mxu0 0
        %1008 = vmatpush.bf16.xpose.msra.mxu0 0
        %1009 = vmatpush.bf16.xpose.msra.mxu0 %v985
        %1010 = vmatpush.bf16.xpose.msra.mxu0 %v983
        %1011 = vmatmul.bf16.gmra.mxu0 %v969
        %v1012 = vpop.f32.mrf.mxu0
        %v1013 = vadd.f32 %v1000, %v1012
        %v1014 = vpop.f32.mrf.mxu0
        %1015 = vdwg.mxu0
        %1017 = vrot.lane.b32.xlu0 %v1013, 32
        %v1018 = vpop.permute.xlu0 %1017
        %v1020 = vmul.f32 %v724, %v1018
        %v1021 = vmul.f32 %v670, %v724
        %v1023 = vrot.slane %v1020, 7
        %1024 = vrot.lane.b32.xlu0 %v1023, 96
        %v1025 = vpop.permute.xlu0 %1024
        %v1027 = vmul.f32 %v670, %v1025
        %v1028 = vsel %vm900, %v1021, %v1027
        %v1029 = vsel %vm902, %v1028, %v670
        %v1030 = vmul.f32 %v724, %v724
        %v1031 = vmul.f32 %v1020, %v1020
        %v1033 = vrot.slane %v1031, 7
        %1034 = vrot.lane.b32.xlu0 %v1033, 96
        %v1035 = vpop.permute.xlu0 %1034
        %v1037 = vsel %vm900, %v1030, %v1035
        %v1038 = vsel %vm902, %v1037, 1.0
        %v1039 = vsel %vm702, %v1029, 0.0
        %1041 = vrot.lane.b32.xlu0 %v1038, 32
        %v1042 = vpop.permute.xlu0 %1041
        %v1044 = vsel %vm702, 0.0, %v1042
        %v1046 = vrot.slane %v1044, 5
        %v1048 = vsel %vm904, %v1039, %v1046
        %v1049 = vpack.c.bf16 %v1048, %v1048
        %v1054 = vunpack.c.l.b16 %v884
        %v1055 = vunpack.c.h.b16 %v884
        %v1056 = vunpack.c.l.b16 %v885
        %v1057 = vunpack.c.h.b16 %v885
        %v1058 = vunpack.c.l.b16 %v886
        %v1059 = vunpack.c.h.b16 %v886
        %v1060 = vunpack.c.l.b16 %v887
        %v1061 = vunpack.c.h.b16 %v887
        %v1062 = vpack.c.b16 %v1056, %v1054
        %v1063 = vpack.c.b16 %v1057, %v1055
        %v1064 = vpack.c.b16 %v1060, %v1058
        %v1065 = vpack.c.b16 %v1061, %v1059
        %vm1070 = vcmask 523264
        %v1072 = vsel %vm1070, %v1049, 0
        %1074 = vmatpush.bf16.msra.mxu0 0
        %1075 = vmatpush.bf16.msra.mxu0 0
        %1076 = vmatpush.bf16.msra.mxu0 0
        %1077 = vmatpush.bf16.msra.mxu0 0
        %1078 = vmatpush.bf16.msra.mxu0 %v1064
        %1079 = vmatpush.bf16.msra.mxu0 %v1062
        %1080 = vmatpush.bf16.msra.mxu0 %v984
        %1081 = vmatpush.bf16.msra.mxu0 %v982
        %1082 = vmatmul.bf16.gmra.mxu0 %v1072
        %v1083 = vpop.f32.mrf.mxu0
        %v1084 = vadd.f32 0.0, %v1083
        %v1085 = vpop.f32.mrf.mxu0
        %1086 = vdwg.mxu0
        %1087 = vmatpush.bf16.msra.mxu0 0
        %1088 = vmatpush.bf16.msra.mxu0 0
        %1089 = vmatpush.bf16.msra.mxu0 0
        %1090 = vmatpush.bf16.msra.mxu0 0
        %1091 = vmatpush.bf16.msra.mxu0 %v1065
        %1092 = vmatpush.bf16.msra.mxu0 %v1063
        %1093 = vmatpush.bf16.msra.mxu0 %v985
        %1094 = vmatpush.bf16.msra.mxu0 %v983
        %1095 = vmatmul.bf16.gmra.mxu0 %v1072
        %v1096 = vpop.f32.mrf.mxu0
        %v1097 = vadd.f32 0.0, %v1096
        %v1098 = vpop.f32.mrf.mxu0
        %1099 = vdwg.mxu0
        %v1100 = vmax.f32 %v1084, 1e-24
        %v1101 = vmax.f32 %v1097, 1e-24
        %v1102 = vrsqrt.pop %v1100
        %v1103 = vmul.f32 %v1102, %v1100
        %v1104 = vmul.f32 %v1103, %v1102
        %v1105 = vmul.f32 0.5, %v1104
        %v1106 = vsub.f32 1.5, %v1105
        %v1107 = vmul.f32 %v1102, %v1106
        %vm1108 = vweird.f32 %v1100
        %vm1109 = vweird.f32 %v1102
        %vm1110 = vmor %vm1108, %vm1109
        %v1111 = vsel %vm1110, %v1102, %v1107
        %v1112 = vrsqrt.pop %v1101
        %v1113 = vmul.f32 %v1112, %v1101
        %v1114 = vmul.f32 %v1113, %v1112
        %v1115 = vmul.f32 0.5, %v1114
        %v1116 = vsub.f32 1.5, %v1115
        %v1117 = vmul.f32 %v1112, %v1116
        %vm1118 = vweird.f32 %v1101
        %vm1119 = vweird.f32 %v1112
        %vm1120 = vmor %vm1118, %vm1119
        %v1121 = vsel %vm1120, %v1112, %v1117
        %v1124 = vrot.slane %v1111, 3
        %v1125 = vrot.slane %v1121, 3
        %v1128 = vmul.f32 %v1084, %v1124
        %v1129 = vmul.f32 %v1097, %v1125
        %1131 = vset.pattern.permute.xlu0 0
        %1132 = vperm.xlu0 %1131, %v671
        %v1133 = vpop.permute.xlu0 %1132
        %v1135 = vadd.f32 %v1128, %v1133
        %v1136 = vadd.f32 %v1129, %v1133
        %v1137 = vmul.f32 %v1135, %v742
        %v1138 = vmul.f32 %v1136, %v742
        %v1141 = vrot.slane %v927, 3
        %v1142 = vrot.slane %v947, 3
        %v1145 = vadd.f32 %v1137, %v1141
        %v1146 = vadd.f32 %v1138, %v1142
        %v1147 = vmul.f32 %v1135, %v730
        %v1148 = vmul.f32 %v1136, %v730
        %v1149 = vrot.slane %v927, 2
        %v1150 = vrot.slane %v947, 2
        %v1153 = vadd.f32 %v1147, %v1149
        %v1154 = vadd.f32 %v1148, %v1150
        %v1155 = vmin.f32 %v1145, %v1153
        %v1156 = vmin.f32 %v1146, %v1154
        %v1157 = vrot.slane %v927, 7
        %v1158 = vrot.slane %v947, 7
        %v1161 = vmin.f32 %v927, %v1157
        %v1162 = vmin.f32 %v947, %v1158
        %v1163 = vmax.f32 %v927, %v1157
        %v1164 = vmax.f32 %v947, %v1158
        %1165 = vrot.lane.b32.xlu0 %v1013, 64
        %v1166 = vpop.permute.xlu0 %1165
        %v1168 = vmul.f32 %v724, %v1166
        %v1169 = vmul.f32 %v1168, %v1168
        %1171 = vrot.lane.b32.xlu0 %v1169, 64
        %v1172 = vpop.permute.xlu0 %1171
        %vm1174 = vcmask 253952
        %v1175 = vsel %vm1174, %v1172, 0.0
        %1176 = vadd.xlane.f32.xlu0 %v1175
        %v1177 = vpop.xlane.xlu0 %1176
        %v1178 = vmax.f32 %v1177, 1e-24
        %v1179 = vrsqrt.pop %v1178
        %v1180 = vmul.f32 %v1179, %v1178
        %v1181 = vmul.f32 %v1180, %v1179
        %v1182 = vmul.f32 0.5, %v1181
        %v1183 = vsub.f32 1.5, %v1182
        %v1184 = vmul.f32 %v1179, %v1183
        %vm1185 = vweird.f32 %v1178
        %vm1186 = vweird.f32 %v1179
        %vm1187 = vmor %vm1185, %vm1186
        %v1188 = vsel %vm1187, %v1179, %v1184
        %v1189 = vmul.f32 %v1168, %v1188
        %v1190 = vrot.slane %v1013, 1
        %1191 = vrot.lane.b32.xlu0 %v1190, 96
        %v1192 = vpop.permute.xlu0 %1191
        %v1194 = vmul.f32 %v724, %v1192
        %1195 = vrot.lane.b32.xlu0 %v1013, 96
        %v1196 = vpop.permute.xlu0 %1195
        %v1198 = vmul.f32 %v1194, %v1196
        %v1199 = vmul.f32 %v1198, %v1198
        %1201 = vrot.lane.b32.xlu0 %v1199, 32
        %v1202 = vpop.permute.xlu0 %1201
        %v1204 = vsel %vm1174, %v1202, 0.0
        %1205 = vadd.xlane.f32.xlu0 %v1204
        %v1206 = vpop.xlane.xlu0 %1205
        %v1207 = vmax.f32 %v1206, 1e-24
        %v1208 = vrsqrt.pop %v1207
        %v1209 = vmul.f32 %v1208, %v1207
        %v1210 = vmul.f32 %v1209, %v1208
        %v1211 = vmul.f32 0.5, %v1210
        %v1212 = vsub.f32 1.5, %v1211
        %v1213 = vmul.f32 %v1208, %v1212
        %vm1214 = vweird.f32 %v1207
        %vm1215 = vweird.f32 %v1208
        %vm1216 = vmor %vm1214, %vm1215
        %v1217 = vsel %vm1216, %v1208, %v1213
        %v1218 = vmul.f32 %v1198, %v1217
        %v1220 = vperm.slane %v859, 0
        %v1223 = vrot.slane %v865, 6
        %v1226 = vrot.slane %v871, 5
        %1227 = vrot.lane.b32.xlu0 %v1226, 120
        %v1228 = vpop.permute.xlu0 %1227
        %v1231 = vrot.slane %v877, 4
        %1232 = vrot.lane.b32.xlu0 %v1231, 120
        %v1233 = vpop.permute.xlu0 %1232
        %v1235 = vrot.slane %v802, 3
        %1236 = vrot.lane.b32.xlu0 %v1235, 112
        %v1237 = vpop.permute.xlu0 %1236
        %v1239 = vsel %vm900, %v853, %v1220
        %v1240 = vsel %vm902, %v1239, %v1223
        %v1241 = vsel %vm904, %v1240, %v1228
        %vm1242 = vcmask 1043456
        %v1243 = vsel %vm1242, %v1241, %v1233
        %vm1244 = vcmask 1044480
        %v1245 = vsel %vm1244, %v1243, %v1237
        %v1248 = vrot.slane %v1161, 6
        %v1249 = vrot.slane %v1162, 6
        %v1254 = vrot.slane %v1163, 5
        %v1255 = vrot.slane %v1164, 5
        %v1260 = vrot.slane %v1155, 3
        %v1261 = vrot.slane %v1156, 3
        %v1264 = vsel %vm904, %v1135, %v1248
        %v1265 = vsel %vm904, %v1136, %v1249
        %v1266 = vsel %vm1242, %v1264, %v1254
        %v1267 = vsel %vm1242, %v1265, %v1255
        %v1268 = vsel %vm1244, %v1266, %v1260
        %v1269 = vsel %vm1244, %v1267, %v1261
        %v1270 = vperm.slane %v845, 0
        %1272 = vrot.lane.b32.xlu0 %v669, 104
        %v1273 = vpop.permute.xlu0 %1272
        %v1275 = vmul.f32 %v1270, %v1273
        %v1276 = vsel %vm672, %v1275, 0.0
        %1277 = vadd.xlane.f32.xlu0 %v1276
        %v1278 = vpop.xlane.xlu0 %1277
        %v1279 = vmul.f32 %v1278, %v878
        %v1280 = vmul.f32 %v1278, %v879
        %1281 = vxpose.xlu0.b32.start [1/16] %v1245, 128
        %1282 = vxpose.xlu0.b32.cont [2/16] 0.0, 128
        %1283 = vxpose.xlu0.b32.cont [3/16] 0.0, 128
        %1284 = vxpose.xlu0.b32.cont [4/16] 0.0, 128
        %1285 = vxpose.xlu0.b32.cont [5/16] 0.0, 128
        %1286 = vxpose.xlu0.b32.cont [6/16] 0.0, 128
        %1287 = vxpose.xlu0.b32.cont [7/16] 0.0, 128
        %1288 = vxpose.xlu0.b32.cont [8/16] 0.0, 128
        %1289 = vxpose.xlu0.b32.cont [9/16] 0.0, 128
        %1290 = vxpose.xlu0.b32.cont [10/16] 0.0, 128
        %1291 = vxpose.xlu0.b32.cont [11/16] 0.0, 128
        %1292 = vxpose.xlu0.b32.cont [12/16] 0.0, 128
        %1293 = vxpose.xlu0.b32.cont [13/16] 0.0, 128
        %1294 = vxpose.xlu0.b32.cont [14/16] 0.0, 128
        %1295 = vxpose.xlu0.b32.cont [15/16] 0.0, 128
        %1296 = vxpose.xlu0.b32.end [16/16] 0.0, 128
        %v1297 = vpop.trf.xlu0
        %v1298 = vpop.trf.xlu0
        %v1299 = vpop.trf.xlu0
        %v1300 = vpop.trf.xlu0
        %v1301 = vpop.trf.xlu0
        %v1302 = vpop.trf.xlu0
        %v1303 = vpop.trf.xlu0
        %v1304 = vpop.trf.xlu0
        %v1305 = vpop.trf.xlu0
        %v1306 = vpop.trf.xlu0
        %v1307 = vpop.trf.xlu0
        %v1308 = vpop.trf.xlu0
        %v1309 = vpop.trf.xlu0
        %v1310 = vpop.trf.xlu0
        %v1311 = vpop.trf.xlu0
        %v1312 = vpop.trf.xlu0
        %vm1313 = vcmask 48128
        %v1315 = vsel %vm1313, %v1297, 0
        %vm1317 = vcmask 1045504
        %v1319 = vsel %vm1317, %v1268, 0
        %v1322 = vsel %vm1317, %v1269, 0
        %1324 = vmatpush.msra.mxu0 0.0
        %1325 = vmatpush.msra.mxu0 0.0
        %1326 = vmatpush.msra.mxu0 0.0
        %1327 = vmatpush.msra.mxu0 0.0
        %1328 = vmatpush.msra.mxu0 0.0
        %1329 = vmatpush.msra.mxu0 0.0
        %1330 = vmatpush.msra.mxu0 0.0
        %1331 = vmatpush.msra.mxu0 0.0
        %1332 = vmatpush.msra.mxu0 0.0
        %1333 = vmatpush.msra.mxu0 0.0
        %1334 = vmatpush.msra.mxu0 0.0
        %1335 = vmatpush.msra.mxu0 0.0
        %1336 = vmatpush.msra.mxu0 0.0
        %1337 = vmatpush.msra.mxu0 0.0
        %1338 = vmatpush.msra.mxu0 0.0
        %1339 = vmatpush.msra.mxu0 %v1319
        %1340 = vmatmul.f32.gmra.mxu0 %v1315
        %v1341 = vpop.f32.mrf.mxu0
        %v1342 = vadd.f32 %v1279, %v1341
        %1343 = vdwg.mxu0
        %1344 = vmatpush.msra.mxu0 0.0
        %1345 = vmatpush.msra.mxu0 0.0
        %1346 = vmatpush.msra.mxu0 0.0
        %1347 = vmatpush.msra.mxu0 0.0
        %1348 = vmatpush.msra.mxu0 0.0
        %1349 = vmatpush.msra.mxu0 0.0
        %1350 = vmatpush.msra.mxu0 0.0
        %1351 = vmatpush.msra.mxu0 0.0
        %1352 = vmatpush.msra.mxu0 0.0
        %1353 = vmatpush.msra.mxu0 0.0
        %1354 = vmatpush.msra.mxu0 0.0
        %1355 = vmatpush.msra.mxu0 0.0
        %1356 = vmatpush.msra.mxu0 0.0
        %1357 = vmatpush.msra.mxu0 0.0
        %1358 = vmatpush.msra.mxu0 0.0
        %1359 = vmatpush.msra.mxu0 %v1322
        %1360 = vmatmul.f32.gmra.mxu0 %v1315
        %v1361 = vpop.f32.mrf.mxu0
        %v1362 = vadd.f32 %v1280, %v1361
        %1363 = vdwg.mxu0
        %1364 = vst [vmem:[%s647] sm:$0xff] %v1342
        %1365 = vst [vmem:[%s647 + $0x8] sm:$0xff] %v1362
        %v1367 = vperm.slane %v667, 0
        %1368 = vrot.lane.b32.xlu0 %v1367, 32
        %v1369 = vpop.permute.xlu0 %1368
        %v1371 = vsel %vm702, %v665, %v1369
        %v1372 = vsel %vm1070, %v1371, %v1189
        %1374 = vrot.lane.b32.xlu0 %v1218, 96
        %v1375 = vpop.permute.xlu0 %1374
        %v1377 = vsel %vm1070, %v1371, %v1375
        %v1379 = vrot.slane %v1377, 7
        %v1381 = vsel %vm900, %v1372, %v1379
        %v1382 = vld [vmem:[%s10] sm:$0xff]
        %v1383 = vld [vmem:[%s10 + $0x8] sm:$0xff]
        %v1384 = vld [vmem:[%s10 + $0x10] sm:$0xff]
        %v1385 = vld [vmem:[%s10 + $0x18] sm:$0xff]
        %v1386 = vld [vmem:[%s10 + $0x20] sm:$0xff]
        %v1387 = vld [vmem:[%s10 + $0x28] sm:$0xff]
        %v1388 = vld [vmem:[%s10 + $0x30] sm:$0xff]
        %v1389 = vld [vmem:[%s10 + $0x38] sm:$0xff]
        %v1390 = vld [vmem:[%s10 + $0x40] sm:$0xff]
        %v1391 = vld [vmem:[%s10 + $0x48] sm:$0xff]
        %v1392 = vld [vmem:[%s10 + $0x50] sm:$0xff]
        %v1393 = vld [vmem:[%s10 + $0x58] sm:$0xff]
        %v1394 = vld [vmem:[#allocation11] sm:$0x1]
        %v1396 = vperm.slane %v1394, 0
        %vm1398 = vcmask 785408
        %v1400 = vsel %vm1398, %v1381, 0
        %1402 = vmatpush.msra.mxu0 0.0
        %1403 = vmatpush.msra.mxu0 0.0
        %1404 = vmatpush.msra.mxu0 0.0
        %1405 = vmatpush.msra.mxu0 0.0
        %1406 = vmatpush.msra.mxu0 %v1393
        %1407 = vmatpush.msra.mxu0 %v1392
        %1408 = vmatpush.msra.mxu0 %v1391
        %1409 = vmatpush.msra.mxu0 %v1390
        %1410 = vmatpush.msra.mxu0 %v1389
        %1411 = vmatpush.msra.mxu0 %v1388
        %1412 = vmatpush.msra.mxu0 %v1387
        %1413 = vmatpush.msra.mxu0 %v1386
        %1414 = vmatpush.msra.mxu0 %v1385
        %1415 = vmatpush.msra.mxu0 %v1384
        %1416 = vmatpush.msra.mxu0 %v1383
        %1417 = vmatpush.msra.mxu0 %v1382
        %1418 = vmatmul.f32.gmra.mxu0 %v1400
        %v1419 = vpop.f32.mrf.mxu0
        %v1420 = vadd.f32 %v1396, %v1419
        %1421 = vdwg.mxu0
        %v1422 = vmul.f32 %v823, %v667
        %1423 = vset.pattern.permute.xlu0 7
        %1424 = vperm.xlu0 %1423, %v666
        %v1425 = vpop.permute.xlu0 %1424
        %v1427 = vperm.slane %v1425, 0
        %v1428 = vmul.f32 %v1427, %v1420
        %v1429 = vadd.f32 %v1422, %v1428
        %1430 = vset.pattern.permute.xlu0 8
        %1431 = vperm.xlu0 %1430, %v666
        %v1432 = vpop.permute.xlu0 %1431
        %v1434 = vperm.slane %v1432, 0
        %v1435 = vmul.f32 %v1434, %v1420
        %1437 = vst [vmem:[#allocation1] sm:$0xff] %v1435
        %s1438 = scalar_lea.vmem [#allocation1], 1
        %v1439 = vld [vmem:[%s1438] ss:$9 sm:$0xff]
        %1440 = vrot.lane.b32.xlu0 %v1439, 96
        %v1441 = vpop.permute.xlu0 %1440
        %v1443 = vadd.f32 %v1429, %v1441
        %v1445 = vperm.slane %v1443, 0
        %1446 = vrot.lane.b32.xlu0 %v1445, 8
        %v1447 = vpop.permute.xlu0 %1446
        %v1449 = vsel %vm672, %v818, %v1447
        %vm1450 = vcmask 319488
        %1451 = vst.msk [vmem:[%s653] sm:$0x1] %vm1450, %v1449
        %s1452 = sand.u32 %s353, 1
        %s1453 = scalar_lea.sflag [#allocation4], %s1452
        %s1454 = sand.u32 %s353, 1
        %s1455 = smul.addr %s1454, 16
        %s1456 = scalar_lea.vmem [#allocation13], %s1455
        %s1457 = sand.u32 %s379, 1
        %s1458 = scalar_lea.sflag [#allocation15], %s1457
        %s1459 = sand.u32 %s379, 1
        %s1460 = scalar_lea.vmem [#allocation14], %s1459
        // Predicated region
        $region97: #{tpu_custom_call.1} parent=71 // pred_check
          %p1461 = pneg %p363
        $region98: #{tpu_custom_call.1} parent=71 // pred_check_branch
          %1463 = sbr.rel (%p1461) target = $region100
        $region99: #{tpu_custom_call.1} parent=71 // pred_region
          %1465 = vsyncadd %s1453, 0
          %s1466 = smul.addr %s42, 2
          %s1467 = smul.addr %s1466, 8
          %s1468 = scalar_lea.hbm %s13, %s1467
          %s1470 = sshll.u32 %s1456, 4
          %s1471 = int_to_ptr.vmem [resolvable:$true] %s1470
          %s1472 = sshll.u32 %s1468, 4
          %s1473 = int_to_ptr.hbm [resolvable:$true] %s1472
          %1475 = dma.vmem_to_hbm [thread:$0]  %s1471, 256, %s1473, %s1453
        $region100: #{tpu_custom_call.1} parent=71 // pred_fallthru
          _
        // Predicated region
        $region101: #{tpu_custom_call.1} parent=71 // pred_check
          %p1476 = pneg %p389
        $region102: #{tpu_custom_call.1} parent=71 // pred_check_branch
          %1478 = sbr.rel (%p1476) target = $region104
        $region103: #{tpu_custom_call.1} parent=71 // pred_region
          %1480 = vsyncadd %s1458, 0
          %s1481 = scalar_lea.hbm %s14, %s42
          %s1483 = sshll.u32 %s1460, 4
          %s1484 = int_to_ptr.vmem [resolvable:$true] %s1483
          %s1485 = sshll.u32 %s1481, 4
          %s1486 = int_to_ptr.hbm [resolvable:$true] %s1485
          %1488 = dma.vmem_to_hbm [thread:$0]  %s1484, 16, %s1486, %s1458
        $region104: #{tpu_custom_call.1} parent=71 // pred_fallthru
          _
      $region72: #{tpu_custom_call.1} parent=5 // pred_fallthru
        _
      %p1489 = scmp.le.s32.totalorder 2, %s37
      // Predicated region
      $region105: #{tpu_custom_call.1} parent=5 // pred_check
        %p1490 = pneg %p1489
      $region106: #{tpu_custom_call.1} parent=5 // pred_check_branch
        %1492 = sbr.rel (%p1490) target = $region108
      $region107: #{tpu_custom_call.1} parent=5 // pred_region
        %s1493 = ssub.s32 %s37, 2
        // Predicated region
        $region109: #{tpu_custom_call.1} parent=107 // pred_check
          %p1494 = pneg %p369
        $region110: #{tpu_custom_call.1} parent=107 // pred_check_branch
          %1496 = sbr.rel (%p1494) target = $region112
        $region111: #{tpu_custom_call.1} parent=107 // pred_region
          %s1497 = sand.u32 %s354, 1
          %s1498 = scalar_lea.sflag [#allocation4], %s1497
          %s1499 = sand.u32 %s354, 1
          %s1500 = smul.addr %s1499, 16
          %s1501 = scalar_lea.vmem [#allocation13], %s1500
          %1503 = dma.done %s1498, 256
        $region112: #{tpu_custom_call.1} parent=107 // pred_fallthru
          _
        // Predicated region
        $region113: #{tpu_custom_call.1} parent=107 // pred_check
          %p1504 = pneg %p395
        $region114: #{tpu_custom_call.1} parent=107 // pred_check_branch
          %1506 = sbr.rel (%p1504) target = $region116
        $region115: #{tpu_custom_call.1} parent=107 // pred_region
          %s1507 = sand.u32 %s380, 1
          %s1508 = scalar_lea.sflag [#allocation15], %s1507
          %s1509 = sand.u32 %s380, 1
          %s1510 = scalar_lea.vmem [#allocation14], %s1509
          %1512 = dma.done %s1508, 16
        $region116: #{tpu_custom_call.1} parent=107 // pred_fallthru
          _
      $region108: #{tpu_custom_call.1} parent=5 // pred_fallthru
        _
    $region6: #{tpu_custom_call.1} parent=1 // loop_footer
      %s41 = sadd.s32 1, %s37
    $region7: #{tpu_custom_call.1} parent=1 // loop_footer_branch
      %36 = sbr.rel target = $region3
    $region8: #{tpu_custom_call.1} parent=1 // loop_exit
      _
    %1513 = vsyncpa [#allocation3], 1
    %s1514 = scalar_lea.sflag [#allocation3], 1
    %1515 = vsyncpa %s1514, 1
    %1516 = vsyncpa [#allocation6], 1
    %s1517 = scalar_lea.sflag [#allocation6], 1
    %1518 = vsyncpa %s1517, 1
    %1519 = vsyncpa [#allocation9], 1
    %s1520 = scalar_lea.sflag [#allocation9], 1
    %1521 = vsyncpa %s1520, 1
    %1522 = vsyncpa [#allocation12], 1
    %1523 = vsyncpa [#allocation4], 1
    %s1524 = scalar_lea.sflag [#allocation4], 1
    %1525 = vsyncpa %s1524, 1
    %1526 = vsyncpa [#allocation15], 1
    %s1527 = scalar_lea.sflag [#allocation15], 1
    %1528 = vsyncpa %s1527, 1

</llo_original>
